<compile_context>
chip_gen: v5e
topology: v5e:2x2
jax: 0.10.0
libtpu: 0.0.40
codegen_flags: <defaults>
</compile_context>

<pallas_src>
import jax
import jax.numpy as jnp
import numpy as np
from jax.experimental import pallas as pl
from jax.experimental.pallas import tpu as pltpu

LANE = 128


def _round_up(n, m):
    return ((n + m - 1) // m) * m


def _make_kernel(out_widths, act_dtype, n_relu=2):
    """Fused MLP kernel.  refs = (x, w_0..w_{L-1}, bias_pack, out).

    Layer i computes z = h @ w_i + bias_pack[i, :out_widths[i]] followed by
    ReLU (i < n_relu), Tanh (middle layers) or nothing (last layer).
    """
    n_layers = len(out_widths)

    def kernel(*refs):
        x_ref = refs[0]
        w_refs = refs[1:1 + n_layers]
        b_ref = refs[1 + n_layers]
        o_ref = refs[2 + n_layers]

        biases = b_ref[...]            # (8, max_width) f32, one row per layer
        h = x_ref[...]                 # (tile, input_size) f32
        for i, w_ref in enumerate(w_refs):
            w = w_ref[...]
            # MXU matmul in the weights' dtype (bf16/f32), f32 accumulation.
            z = jnp.dot(h.astype(w.dtype), w,
                        preferred_element_type=jnp.float32)
            z = z + biases[i:i + 1, :out_widths[i]]
            if i == n_layers - 1:
                o_ref[...] = z.astype(o_ref.dtype)
            elif i < n_relu:
                h = jnp.maximum(z, 0.0).astype(act_dtype)
            else:
                # Cast BEFORE tanh: bf16 EUP path on v6e/v7x + half-width
                # inter-layer activations.  Dropout(0.01) == identity (eval).
                h = jnp.tanh(z.astype(act_dtype))

    return kernel


def init_params(input_size, key):
    """PyTorch-style init: U(-1/sqrt(fan_in), +1/sqrt(fan_in)).

    Returns logical (unpadded) f32 params [w1, b1, ..., wf5, bf5] with
    weights stored transposed as (in, out) and biases as (1, out).
    """
    dims = [
        (input_size, 100),  # conv1 (k=1 -> linear)
        (100, 200),         # conv2
        (200, 200),         # fc1
        (200, 100),         # fc2
        (100, 50),          # fc3
        (50, 25),           # fc4
        (25, 10),           # fc5
    ]
    params = []
    for fan_in, fan_out in dims:
        key, kw, kb = jax.random.split(key, 3)
        bound = 1.0 / np.sqrt(fan_in)
        w = jax.random.uniform(kw, (fan_in, fan_out), jnp.float32, -bound, bound)
        b = jax.random.uniform(kb, (1, fan_out), jnp.float32, -bound, bound)
        params += [w, b]
    return params


def prepare_params(params, *, compute_dtype=jnp.bfloat16):
    """Pad weights to lane-dense widths ONCE and pack all biases into one array.

    * Weight i is zero-padded to (fan_in_p, round_up(fan_out, 128)).  Only
      layer 0 keeps its raw fan_in (= input_size): the x BlockSpec covers the
      full feature extent so no 128-padding of the input is needed.  Later
      fan_ins are padded to 128 to match the previous layer's padded output.
    * Biases stay f32 (added to the f32 accumulator) and are packed into one
      (8, max_width) array: a single DMA descriptor instead of seven.
    Zero padding is exact through ReLU/Tanh (f(0) = 0).
    """
    ws = list(params[0::2])
    bs = list(params[1::2])
    padded_ws, out_widths = [], []
    for idx, w in enumerate(ws):
        fi, fo = w.shape
        fi_p = fi if idx == 0 else _round_up(fi, LANE)
        fo_p = _round_up(fo, LANE)
        padded_ws.append(
            jnp.pad(w, ((0, fi_p - fi), (0, fo_p - fo))).astype(compute_dtype))
        out_widths.append(fo_p)

    max_w = max(out_widths)
    rows = _round_up(len(bs), 8)
    b_pack = jnp.zeros((rows, max_w), jnp.float32)
    for i, b in enumerate(bs):
        b_pack = b_pack.at[i, :b.shape[-1]].set(b[0].astype(jnp.float32))

    return padded_ws, b_pack, tuple(out_widths)


def cnn_ffn_forward(x, prepared, *, num_batch_tiles=1, act_dtype=None,
                    out_dim=10, core_parallel=False):
    """x: (B, input_size) f32.  prepared: output of prepare_params()."""
    padded_ws, b_pack, out_widths = prepared
    compute_dtype = padded_ws[0].dtype
    if act_dtype is None:
        act_dtype = compute_dtype          # bf16 epilogue on the fast path
    B, in_dim = x.shape
    assert in_dim == padded_ws[0].shape[0]

    # Row tiles only need sublane (8) alignment -- do NOT pad B to 128/256.
    batch_tile = _round_up(pl.cdiv(B, num_batch_tiles), 8)
    b_pad = batch_tile * num_batch_tiles
    # x stays f32 at its raw feature width; the kernel casts to the weight
    # dtype right before the first matmul (no wrapper-side bf16 cast).
    xp = jnp.pad(x, ((0, b_pad - B), (0, 0)))

    out_pad = out_widths[-1]
    grid = (num_batch_tiles,)
    x_map = lambda i: (i, 0)     # tile over batch
    p_map = lambda i: (0, 0)     # constant index -> re-DMA elided after step 0

    in_specs = [pl.BlockSpec((batch_tile, in_dim), x_map)]
    in_specs += [pl.BlockSpec(tuple(w.shape), p_map) for w in padded_ws]
    in_specs += [pl.BlockSpec(tuple(b_pack.shape), p_map)]
    out_specs = pl.BlockSpec((batch_tile, out_pad), x_map)

    flops = int(2 * b_pad * sum(w.shape[0] * w.shape[1] for w in padded_ws))
    transcendentals = int(b_pad * sum(out_widths[2:-1]))        # tanh layers
    bytes_accessed = int(
        xp.size * xp.dtype.itemsize
        + sum(w.size * w.dtype.itemsize for w in padded_ws)
        + b_pack.size * b_pack.dtype.itemsize
        + b_pad * out_pad * jnp.dtype(compute_dtype).itemsize)

    # "parallel" is fine on single-TC chips; on v7x request explicit core-level
    # sharding of the batch axis (keep num_batch_tiles even there).
    sem = (pltpu.CORE_PARALLEL,) if core_parallel else ("parallel",)

    out = pl.pallas_call(
        _make_kernel(out_widths, act_dtype),
        out_shape=jax.ShapeDtypeStruct((b_pad, out_pad), compute_dtype),
        grid=grid,
        in_specs=in_specs,
        out_specs=out_specs,
        compiler_params=pltpu.CompilerParams(dimension_semantics=sem),
        cost_estimate=pl.CostEstimate(flops=flops,
                                      transcendentals=transcendentals,
                                      bytes_accessed=bytes_accessed),
    )(xp, *padded_ws, b_pack)

    return out[:B, :out_dim].astype(jnp.float32)


def cnn_ffn_reference_np(x, params):
    """float64 numpy ground truth (backend/precision independent)."""
    p = [np.asarray(a, np.float64) for a in params]
    h = np.asarray(x, np.float64)
    h = np.maximum(h @ p[0] + p[1], 0.0)
    h = np.maximum(h @ p[2] + p[3], 0.0)
    h = np.tanh(h @ p[4] + p[5])
    h = np.tanh(h @ p[6] + p[7])
    h = np.tanh(h @ p[8] + p[9])
    h = np.tanh(h @ p[10] + p[11])
    return h @ p[12] + p[13]


if __name__ == "__main__":
    INPUT_SIZE = 16
    BATCH = 300     # deliberately not 8-aligned; pads to 304 rows only

    key = jax.random.PRNGKey(0)
    key, kx = jax.random.split(key)
    x = jax.random.normal(kx, (BATCH, INPUT_SIZE), jnp.float32)
    params = init_params(INPUT_SIZE, key)
    ref = cnn_ffn_reference_np(x, params)

    # 1) f32 weights + f32 activations: tight numerical check.
    #    (Tolerance covers the MXU's default-precision bf16 passes for f32.)
    p_f32 = prepare_params(params, compute_dtype=jnp.float32)
    out_f32 = jax.block_until_ready(cnn_ffn_forward(x, p_f32))
    assert out_f32.shape == (BATCH, 10)
    np.testing.assert_allclose(np.asarray(out_f32), ref, rtol=5e-3, atol=5e-3)

    # 2) Default deployment path: bf16 weights + bf16 activation epilogue
    #    (f32 accumulation), one 304-row grid step (v5e/v6e style launch).
    p_bf16 = prepare_params(params, compute_dtype=jnp.bfloat16)
    out_bf16 = jax.block_until_ready(cnn_ffn_forward(x, p_bf16))
    assert out_bf16.shape == (BATCH, 10)
    np.testing.assert_allclose(np.asarray(out_bf16), ref, rtol=5e-2, atol=5e-2)

    # 3) Same path split into two 152-row batch tiles (how it would be
    #    launched on v7x; there pass core_parallel=True to shard across TCs).
    out_2 = jax.block_until_ready(
        cnn_ffn_forward(x, p_bf16, num_batch_tiles=2))
    np.testing.assert_allclose(np.asarray(out_2), ref, rtol=5e-2, atol=5e-2)

    # 4) v5e mode: bf16 weights on the MXU, f32 activations/tanh on VPU/EUP.
    out_v5e = jax.block_until_ready(
        cnn_ffn_forward(x, p_bf16, act_dtype=jnp.float32))
    np.testing.assert_allclose(np.asarray(out_v5e), ref, rtol=5e-2, atol=5e-2)

    print("KERNEL_OK")
</pallas_src>

<mosaic_0001>
module attributes {stable_mosaic.version = 11 : i64} {
  func.func @kernel(%arg0: i32, %arg1: memref<304x16xf32, #tpu.memory_space<vmem>>, %arg2: memref<16x128xf32, #tpu.memory_space<vmem>>, %arg3: memref<128x256xf32, #tpu.memory_space<vmem>>, %arg4: memref<256x256xf32, #tpu.memory_space<vmem>>, %arg5: memref<256x128xf32, #tpu.memory_space<vmem>>, %arg6: memref<128x128xf32, #tpu.memory_space<vmem>>, %arg7: memref<128x128xf32, #tpu.memory_space<vmem>>, %arg8: memref<128x128xf32, #tpu.memory_space<vmem>>, %arg9: memref<8x256xf32, #tpu.memory_space<vmem>>, %arg10: memref<304x128xf32, #tpu.memory_space<vmem>>) attributes {dimension_semantics = [#tpu.dimension_semantics<parallel>], iteration_bounds = array<i64: 1>, scalar_prefetch = 0 : i64, scratch_operands = 0 : i64, tpu.core_type = #tpu.core_type<tc>, window_params = [{transform_indices = @transform_0, window_bounds = array<i64: 304, 16>}, {pipeline_mode = #tpu.pipeline_mode<synchronous>, transform_indices = @transform_1, window_bounds = array<i64: 16, 128>}, {pipeline_mode = #tpu.pipeline_mode<synchronous>, transform_indices = @transform_2, window_bounds = array<i64: 128, 256>}, {pipeline_mode = #tpu.pipeline_mode<synchronous>, transform_indices = @transform_3, window_bounds = array<i64: 256, 256>}, {pipeline_mode = #tpu.pipeline_mode<synchronous>, transform_indices = @transform_4, window_bounds = array<i64: 256, 128>}, {pipeline_mode = #tpu.pipeline_mode<synchronous>, transform_indices = @transform_5, window_bounds = array<i64: 128, 128>}, {pipeline_mode = #tpu.pipeline_mode<synchronous>, transform_indices = @transform_6, window_bounds = array<i64: 128, 128>}, {pipeline_mode = #tpu.pipeline_mode<synchronous>, transform_indices = @transform_7, window_bounds = array<i64: 128, 128>}, {pipeline_mode = #tpu.pipeline_mode<synchronous>, transform_indices = @transform_8, window_bounds = array<i64: 8, 256>}, {transform_indices = @transform_9, window_bounds = array<i64: 304, 128>}]} {
    %c0 = arith.constant 0 : index
    %c0_0 = arith.constant 0 : index
    %0 = vector.load %arg9[%c0, %c0_0] : memref<8x256xf32, #tpu.memory_space<vmem>>, vector<8x256xf32>
    %c0_1 = arith.constant 0 : index
    %c0_2 = arith.constant 0 : index
    %1 = vector.load %arg1[%c0_1, %c0_2] : memref<304x16xf32, #tpu.memory_space<vmem>>, vector<304x16xf32>
    %c0_3 = arith.constant 0 : index
    %c0_4 = arith.constant 0 : index
    %2 = vector.load %arg2[%c0_3, %c0_4] : memref<16x128xf32, #tpu.memory_space<vmem>>, vector<16x128xf32>
    %cst = arith.constant dense<0.000000e+00> : vector<304x128xf32>
    %3 = tpu.matmul %1, %2, %cst {dimension_numbers = #tpu.dot_dimension_numbers<[1], [0], [0], [1], [0, 0, 1, 1], [], []>} : vector<304x16xf32>, vector<16x128xf32>, vector<304x128xf32> -> vector<304x128xf32>
    %4 = vector.extract_strided_slice %0 {offsets = [0, 0], sizes = [1, 128], strides = [1, 1]} : vector<8x256xf32> to vector<1x128xf32>
    %5 = vector.broadcast %4 : vector<1x128xf32> to vector<304x128xf32>
    %6 = arith.addf %3, %5 : vector<304x128xf32>
    %cst_5 = arith.constant 0.000000e+00 : f32
    %7 = vector.broadcast %cst_5 : f32 to vector<304x128xf32>
    %8 = arith.maximumf %6, %7 : vector<304x128xf32>
    %c0_6 = arith.constant 0 : index
    %c0_7 = arith.constant 0 : index
    %9 = vector.load %arg3[%c0_6, %c0_7] : memref<128x256xf32, #tpu.memory_space<vmem>>, vector<128x256xf32>
    %cst_8 = arith.constant dense<0.000000e+00> : vector<304x256xf32>
    %10 = tpu.matmul %8, %9, %cst_8 {dimension_numbers = #tpu.dot_dimension_numbers<[1], [0], [0], [1], [0, 0, 1, 1], [], []>} : vector<304x128xf32>, vector<128x256xf32>, vector<304x256xf32> -> vector<304x256xf32>
    %11 = vector.extract_strided_slice %0 {offsets = [1, 0], sizes = [1, 256], strides = [1, 1]} : vector<8x256xf32> to vector<1x256xf32>
    %12 = vector.broadcast %11 : vector<1x256xf32> to vector<304x256xf32>
    %13 = arith.addf %10, %12 : vector<304x256xf32>
    %cst_9 = arith.constant 0.000000e+00 : f32
    %14 = vector.broadcast %cst_9 : f32 to vector<304x256xf32>
    %15 = arith.maximumf %13, %14 : vector<304x256xf32>
    %c0_10 = arith.constant 0 : index
    %c0_11 = arith.constant 0 : index
    %16 = vector.load %arg4[%c0_10, %c0_11] : memref<256x256xf32, #tpu.memory_space<vmem>>, vector<256x256xf32>
    %cst_12 = arith.constant dense<0.000000e+00> : vector<304x256xf32>
    %17 = tpu.matmul %15, %16, %cst_12 {dimension_numbers = #tpu.dot_dimension_numbers<[1], [0], [0], [1], [0, 0, 1, 1], [], []>} : vector<304x256xf32>, vector<256x256xf32>, vector<304x256xf32> -> vector<304x256xf32>
    %18 = vector.extract_strided_slice %0 {offsets = [2, 0], sizes = [1, 256], strides = [1, 1]} : vector<8x256xf32> to vector<1x256xf32>
    %19 = vector.broadcast %18 : vector<1x256xf32> to vector<304x256xf32>
    %20 = arith.addf %17, %19 : vector<304x256xf32>
    %21 = math.tanh %20 : vector<304x256xf32>
    %c0_13 = arith.constant 0 : index
    %c0_14 = arith.constant 0 : index
    %22 = vector.load %arg5[%c0_13, %c0_14] : memref<256x128xf32, #tpu.memory_space<vmem>>, vector<256x128xf32>
    %cst_15 = arith.constant dense<0.000000e+00> : vector<304x128xf32>
    %23 = tpu.matmul %21, %22, %cst_15 {dimension_numbers = #tpu.dot_dimension_numbers<[1], [0], [0], [1], [0, 0, 1, 1], [], []>} : vector<304x256xf32>, vector<256x128xf32>, vector<304x128xf32> -> vector<304x128xf32>
    %24 = vector.extract_strided_slice %0 {offsets = [3, 0], sizes = [1, 128], strides = [1, 1]} : vector<8x256xf32> to vector<1x128xf32>
    %25 = vector.broadcast %24 : vector<1x128xf32> to vector<304x128xf32>
    %26 = arith.addf %23, %25 : vector<304x128xf32>
    %27 = math.tanh %26 : vector<304x128xf32>
    %c0_16 = arith.constant 0 : index
    %c0_17 = arith.constant 0 : index
    %28 = vector.load %arg6[%c0_16, %c0_17] : memref<128x128xf32, #tpu.memory_space<vmem>>, vector<128x128xf32>
    %cst_18 = arith.constant dense<0.000000e+00> : vector<304x128xf32>
    %29 = tpu.matmul %27, %28, %cst_18 {dimension_numbers = #tpu.dot_dimension_numbers<[1], [0], [0], [1], [0, 0, 1, 1], [], []>} : vector<304x128xf32>, vector<128x128xf32>, vector<304x128xf32> -> vector<304x128xf32>
    %30 = vector.extract_strided_slice %0 {offsets = [4, 0], sizes = [1, 128], strides = [1, 1]} : vector<8x256xf32> to vector<1x128xf32>
    %31 = vector.broadcast %30 : vector<1x128xf32> to vector<304x128xf32>
    %32 = arith.addf %29, %31 : vector<304x128xf32>
    %33 = math.tanh %32 : vector<304x128xf32>
    %c0_19 = arith.constant 0 : index
    %c0_20 = arith.constant 0 : index
    %34 = vector.load %arg7[%c0_19, %c0_20] : memref<128x128xf32, #tpu.memory_space<vmem>>, vector<128x128xf32>
    %cst_21 = arith.constant dense<0.000000e+00> : vector<304x128xf32>
    %35 = tpu.matmul %33, %34, %cst_21 {dimension_numbers = #tpu.dot_dimension_numbers<[1], [0], [0], [1], [0, 0, 1, 1], [], []>} : vector<304x128xf32>, vector<128x128xf32>, vector<304x128xf32> -> vector<304x128xf32>
    %36 = vector.extract_strided_slice %0 {offsets = [5, 0], sizes = [1, 128], strides = [1, 1]} : vector<8x256xf32> to vector<1x128xf32>
    %37 = vector.broadcast %36 : vector<1x128xf32> to vector<304x128xf32>
    %38 = arith.addf %35, %37 : vector<304x128xf32>
    %39 = math.tanh %38 : vector<304x128xf32>
    %c0_22 = arith.constant 0 : index
    %c0_23 = arith.constant 0 : index
    %40 = vector.load %arg8[%c0_22, %c0_23] : memref<128x128xf32, #tpu.memory_space<vmem>>, vector<128x128xf32>
    %cst_24 = arith.constant dense<0.000000e+00> : vector<304x128xf32>
    %41 = tpu.matmul %39, %40, %cst_24 {dimension_numbers = #tpu.dot_dimension_numbers<[1], [0], [0], [1], [0, 0, 1, 1], [], []>} : vector<304x128xf32>, vector<128x128xf32>, vector<304x128xf32> -> vector<304x128xf32>
    %42 = vector.extract_strided_slice %0 {offsets = [6, 0], sizes = [1, 128], strides = [1, 1]} : vector<8x256xf32> to vector<1x128xf32>
    %43 = vector.broadcast %42 : vector<1x128xf32> to vector<304x128xf32>
    %44 = arith.addf %41, %43 : vector<304x128xf32>
    %c0_25 = arith.constant 0 : index
    %c0_26 = arith.constant 0 : index
    %45 = vector.load %arg10[%c0_25, %c0_26] : memref<304x128xf32, #tpu.memory_space<vmem>>, vector<304x128xf32>
    tpu.vector_store %arg10[%c0_25, %c0_26], %44 {strides = array<i32>} : memref<304x128xf32, #tpu.memory_space<vmem>>, vector<304x128xf32>,
    return
  }
  func.func @transform_0(%arg0: i32) -> (i32, i32) {
    %c0_i32 = arith.constant 0 : i32
    %c0_i32_0 = arith.constant 0 : i32
    return %arg0, %c0_i32 : i32, i32
  }
  func.func @transform_1(%arg0: i32) -> (i32, i32) {
    %c0_i32 = arith.constant 0 : i32
    %c0_i32_0 = arith.constant 0 : i32
    %c0_i32_1 = arith.constant 0 : i32
    return %c0_i32, %c0_i32_0 : i32, i32
  }
  func.func @transform_2(%arg0: i32) -> (i32, i32) {
    %c0_i32 = arith.constant 0 : i32
    %c0_i32_0 = arith.constant 0 : i32
    %c0_i32_1 = arith.constant 0 : i32
    return %c0_i32, %c0_i32_0 : i32, i32
  }
  func.func @transform_3(%arg0: i32) -> (i32, i32) {
    %c0_i32 = arith.constant 0 : i32
    %c0_i32_0 = arith.constant 0 : i32
    %c0_i32_1 = arith.constant 0 : i32
    return %c0_i32, %c0_i32_0 : i32, i32
  }
  func.func @transform_4(%arg0: i32) -> (i32, i32) {
    %c0_i32 = arith.constant 0 : i32
    %c0_i32_0 = arith.constant 0 : i32
    %c0_i32_1 = arith.constant 0 : i32
    return %c0_i32, %c0_i32_0 : i32, i32
  }
  func.func @transform_5(%arg0: i32) -> (i32, i32) {
    %c0_i32 = arith.constant 0 : i32
    %c0_i32_0 = arith.constant 0 : i32
    %c0_i32_1 = arith.constant 0 : i32
    return %c0_i32, %c0_i32_0 : i32, i32
  }
  func.func @transform_6(%arg0: i32) -> (i32, i32) {
    %c0_i32 = arith.constant 0 : i32
    %c0_i32_0 = arith.constant 0 : i32
    %c0_i32_1 = arith.constant 0 : i32
    return %c0_i32, %c0_i32_0 : i32, i32
  }
  func.func @transform_7(%arg0: i32) -> (i32, i32) {
    %c0_i32 = arith.constant 0 : i32
    %c0_i32_0 = arith.constant 0 : i32
    %c0_i32_1 = arith.constant 0 : i32
    return %c0_i32, %c0_i32_0 : i32, i32
  }
  func.func @transform_8(%arg0: i32) -> (i32, i32) {
    %c0_i32 = arith.constant 0 : i32
    %c0_i32_0 = arith.constant 0 : i32
    %c0_i32_1 = arith.constant 0 : i32
    return %c0_i32, %c0_i32_0 : i32, i32
  }
  func.func @transform_9(%arg0: i32) -> (i32, i32) {
    %c0_i32 = arith.constant 0 : i32
    %c0_i32_0 = arith.constant 0 : i32
    return %arg0, %c0_i32 : i32, i32
  }
}

</mosaic_0001>

<llo_original>
// kernel: tpu_custom_call.1
$region0: #{tpu_custom_call.1}
  #allocation0 [shape = 'u32[]', space=smem, size = 0x4, offset = 0x4, fixed_abs, tag = 'smem constant byte address 0x4 - core index']
  #allocation1 [shape = 'u32[72,128]{1,0:T(1,128)}', space=vmem, size = 0x9000, scoped, tag = 'internal scratch']
  %s0 = inlined_call_operand.vmem [shape: f32[304,16], index: 0, kind: input, shape index: {}]
  %s1 = inlined_call_operand.vmem [shape: f32[16,128], index: 1, kind: input, shape index: {}]
  %s2 = inlined_call_operand.vmem [shape: f32[128,256], index: 2, kind: input, shape index: {}]
  %s3 = inlined_call_operand.hbm [shape: f32[256,256], index: 3, kind: input, shape index: {}]
  %s4 = inlined_call_operand.hbm [shape: f32[256,128], index: 4, kind: input, shape index: {}]
  %s5 = inlined_call_operand.hbm [shape: f32[128,128], index: 5, kind: input, shape index: {}]
  %s6 = inlined_call_operand.hbm [shape: f32[128,128], index: 6, kind: input, shape index: {}]
  %s7 = inlined_call_operand.hbm [shape: f32[128,128], index: 7, kind: input, shape index: {}]
  %s8 = inlined_call_operand.vmem [shape: f32[8,256], index: 8, kind: input, shape index: {}]
  %s9 = inlined_call_operand.hbm [shape: f32[304,128], index: 9, kind: output, shape index: {}]
  %s10 = sld [smem:[#allocation0]]
  $region66: #{tpu_custom_call.1} parent=0
    _
  %s12 = ssub.s32 1, %s10
  %s13 = scalar_select 0, %s12, %s10
  $region1: #{tpu_custom_call.1} parent=0
    #allocation2 [shape = 'u8[262144]{0}', space=vmem, size = 0x40000, scoped, tag = 'input window, operand 3, single buffered']
    #allocation3 [shape = 's32[1]{0}', space=sflag, size = 0x4, scoped, tag = 'scoped memory for tpu_custom_call.1']
    #allocation4 [shape = 's32[1]{0}', space=sflag, size = 0x4, scoped, tag = 'scoped memory for tpu_custom_call.1']
    #allocation5 [shape = 'u8[131072]{0}', space=vmem, size = 0x20000, scoped, tag = 'input window, operand 4, single buffered']
    #allocation6 [shape = 's32[1]{0}', space=sflag, size = 0x4, scoped, tag = 'scoped memory for tpu_custom_call.1']
    #allocation7 [shape = 'u8[65536]{0}', space=vmem, size = 0x10000, scoped, tag = 'input window, operand 5, single buffered']
    #allocation8 [shape = 'u8[65536]{0}', space=vmem, size = 0x10000, scoped, tag = 'input window, operand 6, single buffered']
    #allocation9 [shape = 's32[1]{0}', space=sflag, size = 0x4, scoped, tag = 'scoped memory for tpu_custom_call.1']
    #allocation10 [shape = 'u8[65536]{0}', space=vmem, size = 0x10000, scoped, tag = 'input window, operand 7, single buffered']
    #allocation11 [shape = 'u8[155648]{0}', space=vmem, size = 0x26000, scoped, tag = 'output window, operand 0, single buffered']
    %14 = vsyncpa [#allocation3], 0
    %15 = vsyncpa [#allocation6], 0
    %16 = vsyncpa [#allocation9], 0
    %17 = vsyncpa [#allocation4], 0
    // Predicated region
    $region2: #{tpu_custom_call.1} parent=1 // pred_check
      _
    $region3: #{tpu_custom_call.1} parent=1 // pred_check_branch
      %19 = sbr.rel (0) target = $region5
    $region4: #{tpu_custom_call.1} parent=1 // pred_region
      _
    $region5: #{tpu_custom_call.1} parent=1 // pred_fallthru
      _
    // Predicated region
    $region6: #{tpu_custom_call.1} parent=1 // pred_check
      _
    $region7: #{tpu_custom_call.1} parent=1 // pred_check_branch
      %21 = sbr.rel (0) target = $region9
    $region8: #{tpu_custom_call.1} parent=1 // pred_region
      _
    $region9: #{tpu_custom_call.1} parent=1 // pred_fallthru
      _
    // Predicated region
    $region10: #{tpu_custom_call.1} parent=1 // pred_check
      _
    $region11: #{tpu_custom_call.1} parent=1 // pred_check_branch
      %23 = sbr.rel (0) target = $region13
    $region12: #{tpu_custom_call.1} parent=1 // pred_region
      _
    $region13: #{tpu_custom_call.1} parent=1 // pred_fallthru
      _
    // Predicated region
    $region14: #{tpu_custom_call.1} parent=1 // pred_check
      _
    $region15: #{tpu_custom_call.1} parent=1 // pred_check_branch
      %25 = sbr.rel (0) target = $region17
    $region16: #{tpu_custom_call.1} parent=1 // pred_region
      %27 = vsyncadd [#allocation3], 0
      %s28 = sshll.u32 %s3, 4
      %s29 = int_to_ptr.hbm [resolvable:$true] %s28
      %s30 = sshll.u32 [#allocation2], 4
      %s31 = int_to_ptr.vmem [resolvable:$true] %s30
      %36 = dma.hbm_to_vmem [thread:$0]  %s29, 8192, %s31, [#allocation3], 256, 256, 16
    $region17: #{tpu_custom_call.1} parent=1 // pred_fallthru
      _
    // Predicated region
    $region18: #{tpu_custom_call.1} parent=1 // pred_check
      _
    $region19: #{tpu_custom_call.1} parent=1 // pred_check_branch
      %38 = sbr.rel (0) target = $region21
    $region20: #{tpu_custom_call.1} parent=1 // pred_region
      %40 = vsyncadd [#allocation6], 0
      %s41 = sshll.u32 %s4, 4
      %s42 = int_to_ptr.hbm [resolvable:$true] %s41
      %s43 = sshll.u32 [#allocation5], 4
      %s44 = int_to_ptr.vmem [resolvable:$true] %s43
      %49 = dma.hbm_to_vmem [thread:$0]  %s42, 4096, %s44, [#allocation6], 128, 128, 8
    $region21: #{tpu_custom_call.1} parent=1 // pred_fallthru
      _
    // Predicated region
    $region22: #{tpu_custom_call.1} parent=1 // pred_check
      _
    $region23: #{tpu_custom_call.1} parent=1 // pred_check_branch
      %51 = sbr.rel (0) target = $region25
    $region24: #{tpu_custom_call.1} parent=1 // pred_region
      %53 = vsyncadd [#allocation6], 0
      %s54 = sshll.u32 %s5, 4
      %s55 = int_to_ptr.hbm [resolvable:$true] %s54
      %s56 = sshll.u32 [#allocation7], 4
      %s57 = int_to_ptr.vmem [resolvable:$true] %s56
      %62 = dma.hbm_to_vmem [thread:$0]  %s55, 2048, %s57, [#allocation6], 128, 128, 8
    $region25: #{tpu_custom_call.1} parent=1 // pred_fallthru
      _
    // Predicated region
    $region26: #{tpu_custom_call.1} parent=1 // pred_check
      _
    $region27: #{tpu_custom_call.1} parent=1 // pred_check_branch
      %64 = sbr.rel (0) target = $region29
    $region28: #{tpu_custom_call.1} parent=1 // pred_region
      %66 = vsyncadd [#allocation9], 0
      %s67 = sshll.u32 %s6, 4
      %s68 = int_to_ptr.hbm [resolvable:$true] %s67
      %s69 = sshll.u32 [#allocation8], 4
      %s70 = int_to_ptr.vmem [resolvable:$true] %s69
      %75 = dma.hbm_to_vmem [thread:$0]  %s68, 2048, %s70, [#allocation9], 128, 128, 8
    $region29: #{tpu_custom_call.1} parent=1 // pred_fallthru
      _
    // Predicated region
    $region30: #{tpu_custom_call.1} parent=1 // pred_check
      _
    $region31: #{tpu_custom_call.1} parent=1 // pred_check_branch
      %77 = sbr.rel (0) target = $region33
    $region32: #{tpu_custom_call.1} parent=1 // pred_region
      %79 = vsyncadd [#allocation9], 0
      %s80 = sshll.u32 %s7, 4
      %s81 = int_to_ptr.hbm [resolvable:$true] %s80
      %s82 = sshll.u32 [#allocation10], 4
      %s83 = int_to_ptr.vmem [resolvable:$true] %s82
      %88 = dma.hbm_to_vmem [thread:$0]  %s81, 2048, %s83, [#allocation9], 128, 128, 8
    $region33: #{tpu_custom_call.1} parent=1 // pred_fallthru
      _
    // Predicated region
    $region34: #{tpu_custom_call.1} parent=1 // pred_check
      _
    $region35: #{tpu_custom_call.1} parent=1 // pred_check_branch
      %90 = sbr.rel (0) target = $region37
    $region36: #{tpu_custom_call.1} parent=1 // pred_region
      _
    $region37: #{tpu_custom_call.1} parent=1 // pred_fallthru
      _
    // Predicated region
    $region38: #{tpu_custom_call.1} parent=1 // pred_check
      _
    $region39: #{tpu_custom_call.1} parent=1 // pred_check_branch
      %92 = sbr.rel (0) target = $region41
    $region40: #{tpu_custom_call.1} parent=1 // pred_region
      %94 = dma.done [#allocation3], 8192
    $region41: #{tpu_custom_call.1} parent=1 // pred_fallthru
      _
    // Predicated region
    $region42: #{tpu_custom_call.1} parent=1 // pred_check
      _
    $region43: #{tpu_custom_call.1} parent=1 // pred_check_branch
      %96 = sbr.rel (0) target = $region45
    $region44: #{tpu_custom_call.1} parent=1 // pred_region
      %98 = dma.done [#allocation6], 4096
    $region45: #{tpu_custom_call.1} parent=1 // pred_fallthru
      _
    // Predicated region
    $region46: #{tpu_custom_call.1} parent=1 // pred_check
      _
    $region47: #{tpu_custom_call.1} parent=1 // pred_check_branch
      %100 = sbr.rel (0) target = $region49
    $region48: #{tpu_custom_call.1} parent=1 // pred_region
      %102 = dma.done [#allocation6], 2048
    $region49: #{tpu_custom_call.1} parent=1 // pred_fallthru
      _
    // Predicated region
    $region50: #{tpu_custom_call.1} parent=1 // pred_check
      _
    $region51: #{tpu_custom_call.1} parent=1 // pred_check_branch
      %104 = sbr.rel (0) target = $region53
    $region52: #{tpu_custom_call.1} parent=1 // pred_region
      %106 = dma.done [#allocation9], 2048
    $region53: #{tpu_custom_call.1} parent=1 // pred_fallthru
      _
    // Predicated region
    $region54: #{tpu_custom_call.1} parent=1 // pred_check
      _
    $region55: #{tpu_custom_call.1} parent=1 // pred_check_branch
      %108 = sbr.rel (0) target = $region57
    $region56: #{tpu_custom_call.1} parent=1 // pred_region
      %110 = dma.done [#allocation9], 2048
    $region57: #{tpu_custom_call.1} parent=1 // pred_fallthru
      _
    %v111 = vld [vmem:[%s8] sm:$0xff]
    %v112 = vld [vmem:[%s8 + $0x8] sm:$0xff]
    %v113 = vld [vmem:[%s0] sm:$0xff]
    %v114 = vld [vmem:[%s0 + $0x8] sm:$0xff]
    %v115 = vld [vmem:[%s0 + $0x10] sm:$0xff]
    %v116 = vld [vmem:[%s0 + $0x18] sm:$0xff]
    %v117 = vld [vmem:[%s0 + $0x20] sm:$0xff]
    %v118 = vld [vmem:[%s0 + $0x28] sm:$0xff]
    %v119 = vld [vmem:[%s0 + $0x30] sm:$0xff]
    %v120 = vld [vmem:[%s0 + $0x38] sm:$0xff]
    %v121 = vld [vmem:[%s0 + $0x40] sm:$0xff]
    %v122 = vld [vmem:[%s0 + $0x48] sm:$0xff]
    %v123 = vld [vmem:[%s0 + $0x50] sm:$0xff]
    %v124 = vld [vmem:[%s0 + $0x58] sm:$0xff]
    %v125 = vld [vmem:[%s0 + $0x60] sm:$0xff]
    %v126 = vld [vmem:[%s0 + $0x68] sm:$0xff]
    %v127 = vld [vmem:[%s0 + $0x70] sm:$0xff]
    %v128 = vld [vmem:[%s0 + $0x78] sm:$0xff]
    %v129 = vld [vmem:[%s0 + $0x80] sm:$0xff]
    %v130 = vld [vmem:[%s0 + $0x88] sm:$0xff]
    %v131 = vld [vmem:[%s0 + $0x90] sm:$0xff]
    %v132 = vld [vmem:[%s0 + $0x98] sm:$0xff]
    %v133 = vld [vmem:[%s0 + $0xa0] sm:$0xff]
    %v134 = vld [vmem:[%s0 + $0xa8] sm:$0xff]
    %v135 = vld [vmem:[%s0 + $0xb0] sm:$0xff]
    %v136 = vld [vmem:[%s0 + $0xb8] sm:$0xff]
    %v137 = vld [vmem:[%s0 + $0xc0] sm:$0xff]
    %v138 = vld [vmem:[%s0 + $0xc8] sm:$0xff]
    %v139 = vld [vmem:[%s0 + $0xd0] sm:$0xff]
    %v140 = vld [vmem:[%s0 + $0xd8] sm:$0xff]
    %v141 = vld [vmem:[%s0 + $0xe0] sm:$0xff]
    %v142 = vld [vmem:[%s0 + $0xe8] sm:$0xff]
    %v143 = vld [vmem:[%s0 + $0xf0] sm:$0xff]
    %v144 = vld [vmem:[%s0 + $0xf8] sm:$0xff]
    %v145 = vld [vmem:[%s0 + $0x100] sm:$0xff]
    %v146 = vld [vmem:[%s0 + $0x108] sm:$0xff]
    %v147 = vld [vmem:[%s0 + $0x110] sm:$0xff]
    %v148 = vld [vmem:[%s0 + $0x118] sm:$0xff]
    %v149 = vld [vmem:[%s0 + $0x120] sm:$0xff]
    %v150 = vld [vmem:[%s0 + $0x128] sm:$0xff]
    %v151 = vld [vmem:[%s1] sm:$0xff]
    %v152 = vld [vmem:[%s1 + $0x8] sm:$0xff]
    %v153 = vperm.slane %v111, 0
    %vm154 = vcmask 130048
    %v156 = vsel %vm154, %v113, 0
    %v159 = vsel %vm154, %v114, 0
    %v162 = vsel %vm154, %v115, 0
    %v165 = vsel %vm154, %v116, 0
    %v168 = vsel %vm154, %v117, 0
    %v171 = vsel %vm154, %v118, 0
    %v174 = vsel %vm154, %v119, 0
    %v177 = vsel %vm154, %v120, 0
    %v180 = vsel %vm154, %v121, 0
    %v183 = vsel %vm154, %v122, 0
    %v186 = vsel %vm154, %v123, 0
    %v189 = vsel %vm154, %v124, 0
    %v192 = vsel %vm154, %v125, 0
    %v195 = vsel %vm154, %v126, 0
    %v198 = vsel %vm154, %v127, 0
    %v201 = vsel %vm154, %v128, 0
    %v204 = vsel %vm154, %v129, 0
    %v207 = vsel %vm154, %v130, 0
    %v210 = vsel %vm154, %v131, 0
    %v213 = vsel %vm154, %v132, 0
    %v216 = vsel %vm154, %v133, 0
    %v219 = vsel %vm154, %v134, 0
    %v222 = vsel %vm154, %v135, 0
    %v225 = vsel %vm154, %v136, 0
    %v228 = vsel %vm154, %v137, 0
    %v231 = vsel %vm154, %v138, 0
    %v234 = vsel %vm154, %v139, 0
    %v237 = vsel %vm154, %v140, 0
    %v240 = vsel %vm154, %v141, 0
    %v243 = vsel %vm154, %v142, 0
    %v246 = vsel %vm154, %v143, 0
    %v249 = vsel %vm154, %v144, 0
    %v252 = vsel %vm154, %v145, 0
    %v255 = vsel %vm154, %v146, 0
    %v258 = vsel %vm154, %v147, 0
    %v261 = vsel %vm154, %v148, 0
    %v264 = vsel %vm154, %v149, 0
    %v267 = vsel %vm154, %v150, 0
    %269 = vmatpush.msra.mxu0 0.0
    %270 = vmatpush.msra.mxu0 0.0
    %271 = vmatpush.msra.mxu0 0.0
    %272 = vmatpush.msra.mxu0 0.0
    %273 = vmatpush.msra.mxu0 0.0
    %274 = vmatpush.msra.mxu0 0.0
    %275 = vmatpush.msra.mxu0 0.0
    %276 = vmatpush.msra.mxu0 0.0
    %277 = vmatpush.msra.mxu0 0.0
    %278 = vmatpush.msra.mxu0 0.0
    %279 = vmatpush.msra.mxu0 0.0
    %280 = vmatpush.msra.mxu0 0.0
    %281 = vmatpush.msra.mxu0 0.0
    %282 = vmatpush.msra.mxu0 0.0
    %283 = vmatpush.msra.mxu0 %v152
    %284 = vmatpush.msra.mxu0 %v151
    %285 = vmatmul.f32.gmra.mxu0 %v156
    %v286 = vpop.f32.mrf.mxu0
    %v287 = vadd.f32 %v153, %v286
    %288 = vmatmul.f32.gmra.mxu0 %v159
    %v289 = vpop.f32.mrf.mxu0
    %v290 = vadd.f32 %v153, %v289
    %291 = vmatmul.f32.gmra.mxu0 %v162
    %v292 = vpop.f32.mrf.mxu0
    %v293 = vadd.f32 %v153, %v292
    %294 = vmatmul.f32.gmra.mxu0 %v165
    %v295 = vpop.f32.mrf.mxu0
    %v296 = vadd.f32 %v153, %v295
    %297 = vmatmul.f32.gmra.mxu0 %v168
    %v298 = vpop.f32.mrf.mxu0
    %v299 = vadd.f32 %v153, %v298
    %300 = vmatmul.f32.gmra.mxu0 %v171
    %v301 = vpop.f32.mrf.mxu0
    %v302 = vadd.f32 %v153, %v301
    %303 = vmatmul.f32.gmra.mxu0 %v174
    %v304 = vpop.f32.mrf.mxu0
    %v305 = vadd.f32 %v153, %v304
    %306 = vmatmul.f32.gmra.mxu0 %v177
    %v307 = vpop.f32.mrf.mxu0
    %v308 = vadd.f32 %v153, %v307
    %309 = vmatmul.f32.gmra.mxu0 %v180
    %v310 = vpop.f32.mrf.mxu0
    %v311 = vadd.f32 %v153, %v310
    %312 = vmatmul.f32.gmra.mxu0 %v183
    %v313 = vpop.f32.mrf.mxu0
    %v314 = vadd.f32 %v153, %v313
    %315 = vmatmul.f32.gmra.mxu0 %v186
    %v316 = vpop.f32.mrf.mxu0
    %v317 = vadd.f32 %v153, %v316
    %318 = vmatmul.f32.gmra.mxu0 %v189
    %v319 = vpop.f32.mrf.mxu0
    %v320 = vadd.f32 %v153, %v319
    %321 = vmatmul.f32.gmra.mxu0 %v192
    %v322 = vpop.f32.mrf.mxu0
    %v323 = vadd.f32 %v153, %v322
    %324 = vmatmul.f32.gmra.mxu0 %v195
    %v325 = vpop.f32.mrf.mxu0
    %v326 = vadd.f32 %v153, %v325
    %327 = vmatmul.f32.gmra.mxu0 %v198
    %v328 = vpop.f32.mrf.mxu0
    %v329 = vadd.f32 %v153, %v328
    %330 = vmatmul.f32.gmra.mxu0 %v201
    %v331 = vpop.f32.mrf.mxu0
    %v332 = vadd.f32 %v153, %v331
    %333 = vmatmul.f32.gmra.mxu0 %v204
    %v334 = vpop.f32.mrf.mxu0
    %v335 = vadd.f32 %v153, %v334
    %336 = vmatmul.f32.gmra.mxu0 %v207
    %v337 = vpop.f32.mrf.mxu0
    %v338 = vadd.f32 %v153, %v337
    %339 = vmatmul.f32.gmra.mxu0 %v210
    %v340 = vpop.f32.mrf.mxu0
    %v341 = vadd.f32 %v153, %v340
    %342 = vmatmul.f32.gmra.mxu0 %v213
    %v343 = vpop.f32.mrf.mxu0
    %v344 = vadd.f32 %v153, %v343
    %345 = vmatmul.f32.gmra.mxu0 %v216
    %v346 = vpop.f32.mrf.mxu0
    %v347 = vadd.f32 %v153, %v346
    %348 = vmatmul.f32.gmra.mxu0 %v219
    %v349 = vpop.f32.mrf.mxu0
    %v350 = vadd.f32 %v153, %v349
    %351 = vmatmul.f32.gmra.mxu0 %v222
    %v352 = vpop.f32.mrf.mxu0
    %v353 = vadd.f32 %v153, %v352
    %354 = vmatmul.f32.gmra.mxu0 %v225
    %v355 = vpop.f32.mrf.mxu0
    %v356 = vadd.f32 %v153, %v355
    %357 = vmatmul.f32.gmra.mxu0 %v228
    %v358 = vpop.f32.mrf.mxu0
    %v359 = vadd.f32 %v153, %v358
    %360 = vmatmul.f32.gmra.mxu0 %v231
    %v361 = vpop.f32.mrf.mxu0
    %v362 = vadd.f32 %v153, %v361
    %363 = vmatmul.f32.gmra.mxu0 %v234
    %v364 = vpop.f32.mrf.mxu0
    %v365 = vadd.f32 %v153, %v364
    %366 = vmatmul.f32.gmra.mxu0 %v237
    %v367 = vpop.f32.mrf.mxu0
    %v368 = vadd.f32 %v153, %v367
    %369 = vmatmul.f32.gmra.mxu0 %v240
    %v370 = vpop.f32.mrf.mxu0
    %v371 = vadd.f32 %v153, %v370
    %372 = vmatmul.f32.gmra.mxu0 %v243
    %v373 = vpop.f32.mrf.mxu0
    %v374 = vadd.f32 %v153, %v373
    %375 = vmatmul.f32.gmra.mxu0 %v246
    %v376 = vpop.f32.mrf.mxu0
    %v377 = vadd.f32 %v153, %v376
    %378 = vmatmul.f32.gmra.mxu0 %v249
    %v379 = vpop.f32.mrf.mxu0
    %v380 = vadd.f32 %v153, %v379
    %381 = vmatmul.f32.gmra.mxu0 %v252
    %v382 = vpop.f32.mrf.mxu0
    %v383 = vadd.f32 %v153, %v382
    %384 = vmatmul.f32.gmra.mxu0 %v255
    %v385 = vpop.f32.mrf.mxu0
    %v386 = vadd.f32 %v153, %v385
    %387 = vmatmul.f32.gmra.mxu0 %v258
    %v388 = vpop.f32.mrf.mxu0
    %v389 = vadd.f32 %v153, %v388
    %390 = vmatmul.f32.gmra.mxu0 %v261
    %v391 = vpop.f32.mrf.mxu0
    %v392 = vadd.f32 %v153, %v391
    %393 = vmatmul.f32.gmra.mxu0 %v264
    %v394 = vpop.f32.mrf.mxu0
    %v395 = vadd.f32 %v153, %v394
    %396 = vmatmul.f32.gmra.mxu0 %v267
    %v397 = vpop.f32.mrf.mxu0
    %v398 = vadd.f32 %v153, %v397
    %399 = vdwg.mxu0
    %v400 = vmax.f32 %v287, 0.0
    %v401 = vmax.f32 %v290, 0.0
    %v402 = vmax.f32 %v293, 0.0
    %v403 = vmax.f32 %v296, 0.0
    %v404 = vmax.f32 %v299, 0.0
    %v405 = vmax.f32 %v302, 0.0
    %v406 = vmax.f32 %v305, 0.0
    %v407 = vmax.f32 %v308, 0.0
    %v408 = vmax.f32 %v311, 0.0
    %v409 = vmax.f32 %v314, 0.0
    %v410 = vmax.f32 %v317, 0.0
    %v411 = vmax.f32 %v320, 0.0
    %v412 = vmax.f32 %v323, 0.0
    %v413 = vmax.f32 %v326, 0.0
    %v414 = vmax.f32 %v329, 0.0
    %v415 = vmax.f32 %v332, 0.0
    %v416 = vmax.f32 %v335, 0.0
    %v417 = vmax.f32 %v338, 0.0
    %v418 = vmax.f32 %v341, 0.0
    %v419 = vmax.f32 %v344, 0.0
    %v420 = vmax.f32 %v347, 0.0
    %v421 = vmax.f32 %v350, 0.0
    %v422 = vmax.f32 %v353, 0.0
    %v423 = vmax.f32 %v356, 0.0
    %v424 = vmax.f32 %v359, 0.0
    %v425 = vmax.f32 %v362, 0.0
    %v426 = vmax.f32 %v365, 0.0
    %v427 = vmax.f32 %v368, 0.0
    %v428 = vmax.f32 %v371, 0.0
    %v429 = vmax.f32 %v374, 0.0
    %v430 = vmax.f32 %v377, 0.0
    %v431 = vmax.f32 %v380, 0.0
    %v432 = vmax.f32 %v383, 0.0
    %v433 = vmax.f32 %v386, 0.0
    %v434 = vmax.f32 %v389, 0.0
    %v435 = vmax.f32 %v392, 0.0
    %v436 = vmax.f32 %v395, 0.0
    %v437 = vmax.f32 %v398, 0.0
    %v438 = vld [vmem:[%s2] sm:$0xff]
    %v439 = vld [vmem:[%s2 + $0x8] sm:$0xff]
    %v440 = vld [vmem:[%s2 + $0x10] sm:$0xff]
    %v441 = vld [vmem:[%s2 + $0x18] sm:$0xff]
    %v442 = vld [vmem:[%s2 + $0x20] sm:$0xff]
    %v443 = vld [vmem:[%s2 + $0x28] sm:$0xff]
    %v444 = vld [vmem:[%s2 + $0x30] sm:$0xff]
    %v445 = vld [vmem:[%s2 + $0x38] sm:$0xff]
    %v446 = vld [vmem:[%s2 + $0x40] sm:$0xff]
    %v447 = vld [vmem:[%s2 + $0x48] sm:$0xff]
    %v448 = vld [vmem:[%s2 + $0x50] sm:$0xff]
    %v449 = vld [vmem:[%s2 + $0x58] sm:$0xff]
    %v450 = vld [vmem:[%s2 + $0x60] sm:$0xff]
    %v451 = vld [vmem:[%s2 + $0x68] sm:$0xff]
    %v452 = vld [vmem:[%s2 + $0x70] sm:$0xff]
    %v453 = vld [vmem:[%s2 + $0x78] sm:$0xff]
    %v454 = vld [vmem:[%s2 + $0x80] sm:$0xff]
    %v455 = vld [vmem:[%s2 + $0x88] sm:$0xff]
    %v456 = vld [vmem:[%s2 + $0x90] sm:$0xff]
    %v457 = vld [vmem:[%s2 + $0x98] sm:$0xff]
    %v458 = vld [vmem:[%s2 + $0xa0] sm:$0xff]
    %v459 = vld [vmem:[%s2 + $0xa8] sm:$0xff]
    %v460 = vld [vmem:[%s2 + $0xb0] sm:$0xff]
    %v461 = vld [vmem:[%s2 + $0xb8] sm:$0xff]
    %v462 = vld [vmem:[%s2 + $0xc0] sm:$0xff]
    %v463 = vld [vmem:[%s2 + $0xc8] sm:$0xff]
    %v464 = vld [vmem:[%s2 + $0xd0] sm:$0xff]
    %v465 = vld [vmem:[%s2 + $0xd8] sm:$0xff]
    %v466 = vld [vmem:[%s2 + $0xe0] sm:$0xff]
    %v467 = vld [vmem:[%s2 + $0xe8] sm:$0xff]
    %v468 = vld [vmem:[%s2 + $0xf0] sm:$0xff]
    %v469 = vld [vmem:[%s2 + $0xf8] sm:$0xff]
    %v470 = vperm.slane %v111, 1
    %v471 = vperm.slane %v112, 1
    %472 = vmatpush.msra.mxu0 %v468
    %473 = vmatpush.msra.mxu0 %v466
    %474 = vmatpush.msra.mxu0 %v464
    %475 = vmatpush.msra.mxu0 %v462
    %476 = vmatpush.msra.mxu0 %v460
    %477 = vmatpush.msra.mxu0 %v458
    %478 = vmatpush.msra.mxu0 %v456
    %479 = vmatpush.msra.mxu0 %v454
    %480 = vmatpush.msra.mxu0 %v452
    %481 = vmatpush.msra.mxu0 %v450
    %482 = vmatpush.msra.mxu0 %v448
    %483 = vmatpush.msra.mxu0 %v446
    %484 = vmatpush.msra.mxu0 %v444
    %485 = vmatpush.msra.mxu0 %v442
    %486 = vmatpush.msra.mxu0 %v440
    %487 = vmatpush.msra.mxu0 %v438
    %488 = vmatmul.f32.gmra.mxu0 %v400
    %v489 = vpop.f32.mrf.mxu0
    %v490 = vadd.f32 %v470, %v489
    %491 = vmatmul.f32.gmra.mxu0 %v401
    %v492 = vpop.f32.mrf.mxu0
    %v493 = vadd.f32 %v470, %v492
    %494 = vmatmul.f32.gmra.mxu0 %v402
    %v495 = vpop.f32.mrf.mxu0
    %v496 = vadd.f32 %v470, %v495
    %497 = vmatmul.f32.gmra.mxu0 %v403
    %v498 = vpop.f32.mrf.mxu0
    %v499 = vadd.f32 %v470, %v498
    %500 = vmatmul.f32.gmra.mxu0 %v404
    %v501 = vpop.f32.mrf.mxu0
    %v502 = vadd.f32 %v470, %v501
    %503 = vmatmul.f32.gmra.mxu0 %v405
    %v504 = vpop.f32.mrf.mxu0
    %v505 = vadd.f32 %v470, %v504
    %506 = vmatmul.f32.gmra.mxu0 %v406
    %v507 = vpop.f32.mrf.mxu0
    %v508 = vadd.f32 %v470, %v507
    %509 = vmatmul.f32.gmra.mxu0 %v407
    %v510 = vpop.f32.mrf.mxu0
    %v511 = vadd.f32 %v470, %v510
    %512 = vmatmul.f32.gmra.mxu0 %v408
    %v513 = vpop.f32.mrf.mxu0
    %v514 = vadd.f32 %v470, %v513
    %515 = vmatmul.f32.gmra.mxu0 %v409
    %v516 = vpop.f32.mrf.mxu0
    %v517 = vadd.f32 %v470, %v516
    %518 = vmatmul.f32.gmra.mxu0 %v410
    %v519 = vpop.f32.mrf.mxu0
    %v520 = vadd.f32 %v470, %v519
    %521 = vmatmul.f32.gmra.mxu0 %v411
    %v522 = vpop.f32.mrf.mxu0
    %v523 = vadd.f32 %v470, %v522
    %524 = vmatmul.f32.gmra.mxu0 %v412
    %v525 = vpop.f32.mrf.mxu0
    %v526 = vadd.f32 %v470, %v525
    %527 = vmatmul.f32.gmra.mxu0 %v413
    %v528 = vpop.f32.mrf.mxu0
    %v529 = vadd.f32 %v470, %v528
    %530 = vmatmul.f32.gmra.mxu0 %v414
    %v531 = vpop.f32.mrf.mxu0
    %v532 = vadd.f32 %v470, %v531
    %533 = vmatmul.f32.gmra.mxu0 %v415
    %v534 = vpop.f32.mrf.mxu0
    %v535 = vadd.f32 %v470, %v534
    %536 = vmatmul.f32.gmra.mxu0 %v416
    %v537 = vpop.f32.mrf.mxu0
    %v538 = vadd.f32 %v470, %v537
    %539 = vmatmul.f32.gmra.mxu0 %v417
    %v540 = vpop.f32.mrf.mxu0
    %v541 = vadd.f32 %v470, %v540
    %542 = vmatmul.f32.gmra.mxu0 %v418
    %v543 = vpop.f32.mrf.mxu0
    %v544 = vadd.f32 %v470, %v543
    %545 = vmatmul.f32.gmra.mxu0 %v419
    %v546 = vpop.f32.mrf.mxu0
    %v547 = vadd.f32 %v470, %v546
    %548 = vmatmul.f32.gmra.mxu0 %v420
    %v549 = vpop.f32.mrf.mxu0
    %v550 = vadd.f32 %v470, %v549
    %551 = vmatmul.f32.gmra.mxu0 %v421
    %v552 = vpop.f32.mrf.mxu0
    %v553 = vadd.f32 %v470, %v552
    %554 = vmatmul.f32.gmra.mxu0 %v422
    %v555 = vpop.f32.mrf.mxu0
    %v556 = vadd.f32 %v470, %v555
    %557 = vmatmul.f32.gmra.mxu0 %v423
    %v558 = vpop.f32.mrf.mxu0
    %v559 = vadd.f32 %v470, %v558
    %560 = vmatmul.f32.gmra.mxu0 %v424
    %v561 = vpop.f32.mrf.mxu0
    %v562 = vadd.f32 %v470, %v561
    %563 = vmatmul.f32.gmra.mxu0 %v425
    %v564 = vpop.f32.mrf.mxu0
    %v565 = vadd.f32 %v470, %v564
    %566 = vmatmul.f32.gmra.mxu0 %v426
    %v567 = vpop.f32.mrf.mxu0
    %v568 = vadd.f32 %v470, %v567
    %569 = vmatmul.f32.gmra.mxu0 %v427
    %v570 = vpop.f32.mrf.mxu0
    %v571 = vadd.f32 %v470, %v570
    %572 = vmatmul.f32.gmra.mxu0 %v428
    %v573 = vpop.f32.mrf.mxu0
    %v574 = vadd.f32 %v470, %v573
    %575 = vmatmul.f32.gmra.mxu0 %v429
    %v576 = vpop.f32.mrf.mxu0
    %v577 = vadd.f32 %v470, %v576
    %578 = vmatmul.f32.gmra.mxu0 %v430
    %v579 = vpop.f32.mrf.mxu0
    %v580 = vadd.f32 %v470, %v579
    %581 = vmatmul.f32.gmra.mxu0 %v431
    %v582 = vpop.f32.mrf.mxu0
    %v583 = vadd.f32 %v470, %v582
    %584 = vmatmul.f32.gmra.mxu0 %v432
    %v585 = vpop.f32.mrf.mxu0
    %v586 = vadd.f32 %v470, %v585
    %587 = vmatmul.f32.gmra.mxu0 %v433
    %v588 = vpop.f32.mrf.mxu0
    %v589 = vadd.f32 %v470, %v588
    %590 = vmatmul.f32.gmra.mxu0 %v434
    %v591 = vpop.f32.mrf.mxu0
    %v592 = vadd.f32 %v470, %v591
    %593 = vmatmul.f32.gmra.mxu0 %v435
    %v594 = vpop.f32.mrf.mxu0
    %v595 = vadd.f32 %v470, %v594
    %596 = vmatmul.f32.gmra.mxu0 %v436
    %v597 = vpop.f32.mrf.mxu0
    %v598 = vadd.f32 %v470, %v597
    %599 = vmatmul.f32.gmra.mxu0 %v437
    %v600 = vpop.f32.mrf.mxu0
    %v601 = vadd.f32 %v470, %v600
    %602 = vdwg.mxu0
    %603 = vmatpush.msra.mxu0 %v469
    %604 = vmatpush.msra.mxu0 %v467
    %605 = vmatpush.msra.mxu0 %v465
    %606 = vmatpush.msra.mxu0 %v463
    %607 = vmatpush.msra.mxu0 %v461
    %608 = vmatpush.msra.mxu0 %v459
    %609 = vmatpush.msra.mxu0 %v457
    %610 = vmatpush.msra.mxu0 %v455
    %611 = vmatpush.msra.mxu0 %v453
    %612 = vmatpush.msra.mxu0 %v451
    %613 = vmatpush.msra.mxu0 %v449
    %614 = vmatpush.msra.mxu0 %v447
    %615 = vmatpush.msra.mxu0 %v445
    %616 = vmatpush.msra.mxu0 %v443
    %617 = vmatpush.msra.mxu0 %v441
    %618 = vmatpush.msra.mxu0 %v439
    %619 = vmatmul.f32.gmra.mxu0 %v400
    %v620 = vpop.f32.mrf.mxu0
    %v621 = vadd.f32 %v471, %v620
    %622 = vmatmul.f32.gmra.mxu0 %v401
    %v623 = vpop.f32.mrf.mxu0
    %v624 = vadd.f32 %v471, %v623
    %625 = vmatmul.f32.gmra.mxu0 %v402
    %v626 = vpop.f32.mrf.mxu0
    %v627 = vadd.f32 %v471, %v626
    %628 = vmatmul.f32.gmra.mxu0 %v403
    %v629 = vpop.f32.mrf.mxu0
    %v630 = vadd.f32 %v471, %v629
    %631 = vmatmul.f32.gmra.mxu0 %v404
    %v632 = vpop.f32.mrf.mxu0
    %v633 = vadd.f32 %v471, %v632
    %634 = vmatmul.f32.gmra.mxu0 %v405
    %v635 = vpop.f32.mrf.mxu0
    %v636 = vadd.f32 %v471, %v635
    %637 = vmatmul.f32.gmra.mxu0 %v406
    %v638 = vpop.f32.mrf.mxu0
    %v639 = vadd.f32 %v471, %v638
    %640 = vmatmul.f32.gmra.mxu0 %v407
    %v641 = vpop.f32.mrf.mxu0
    %v642 = vadd.f32 %v471, %v641
    %643 = vmatmul.f32.gmra.mxu0 %v408
    %v644 = vpop.f32.mrf.mxu0
    %v645 = vadd.f32 %v471, %v644
    %646 = vmatmul.f32.gmra.mxu0 %v409
    %v647 = vpop.f32.mrf.mxu0
    %v648 = vadd.f32 %v471, %v647
    %649 = vmatmul.f32.gmra.mxu0 %v410
    %v650 = vpop.f32.mrf.mxu0
    %v651 = vadd.f32 %v471, %v650
    %652 = vmatmul.f32.gmra.mxu0 %v411
    %v653 = vpop.f32.mrf.mxu0
    %v654 = vadd.f32 %v471, %v653
    %655 = vmatmul.f32.gmra.mxu0 %v412
    %v656 = vpop.f32.mrf.mxu0
    %v657 = vadd.f32 %v471, %v656
    %658 = vmatmul.f32.gmra.mxu0 %v413
    %v659 = vpop.f32.mrf.mxu0
    %v660 = vadd.f32 %v471, %v659
    %661 = vmatmul.f32.gmra.mxu0 %v414
    %v662 = vpop.f32.mrf.mxu0
    %v663 = vadd.f32 %v471, %v662
    %664 = vmatmul.f32.gmra.mxu0 %v415
    %v665 = vpop.f32.mrf.mxu0
    %v666 = vadd.f32 %v471, %v665
    %667 = vmatmul.f32.gmra.mxu0 %v416
    %v668 = vpop.f32.mrf.mxu0
    %v669 = vadd.f32 %v471, %v668
    %670 = vmatmul.f32.gmra.mxu0 %v417
    %v671 = vpop.f32.mrf.mxu0
    %v672 = vadd.f32 %v471, %v671
    %673 = vmatmul.f32.gmra.mxu0 %v418
    %v674 = vpop.f32.mrf.mxu0
    %v675 = vadd.f32 %v471, %v674
    %676 = vmatmul.f32.gmra.mxu0 %v419
    %v677 = vpop.f32.mrf.mxu0
    %v678 = vadd.f32 %v471, %v677
    %679 = vmatmul.f32.gmra.mxu0 %v420
    %v680 = vpop.f32.mrf.mxu0
    %v681 = vadd.f32 %v471, %v680
    %682 = vmatmul.f32.gmra.mxu0 %v421
    %v683 = vpop.f32.mrf.mxu0
    %v684 = vadd.f32 %v471, %v683
    %685 = vmatmul.f32.gmra.mxu0 %v422
    %v686 = vpop.f32.mrf.mxu0
    %v687 = vadd.f32 %v471, %v686
    %688 = vmatmul.f32.gmra.mxu0 %v423
    %v689 = vpop.f32.mrf.mxu0
    %v690 = vadd.f32 %v471, %v689
    %691 = vmatmul.f32.gmra.mxu0 %v424
    %v692 = vpop.f32.mrf.mxu0
    %v693 = vadd.f32 %v471, %v692
    %694 = vmatmul.f32.gmra.mxu0 %v425
    %v695 = vpop.f32.mrf.mxu0
    %v696 = vadd.f32 %v471, %v695
    %697 = vmatmul.f32.gmra.mxu0 %v426
    %v698 = vpop.f32.mrf.mxu0
    %v699 = vadd.f32 %v471, %v698
    %700 = vmatmul.f32.gmra.mxu0 %v427
    %v701 = vpop.f32.mrf.mxu0
    %v702 = vadd.f32 %v471, %v701
    %703 = vmatmul.f32.gmra.mxu0 %v428
    %v704 = vpop.f32.mrf.mxu0
    %v705 = vadd.f32 %v471, %v704
    %706 = vmatmul.f32.gmra.mxu0 %v429
    %v707 = vpop.f32.mrf.mxu0
    %v708 = vadd.f32 %v471, %v707
    %709 = vmatmul.f32.gmra.mxu0 %v430
    %v710 = vpop.f32.mrf.mxu0
    %v711 = vadd.f32 %v471, %v710
    %712 = vmatmul.f32.gmra.mxu0 %v431
    %v713 = vpop.f32.mrf.mxu0
    %v714 = vadd.f32 %v471, %v713
    %715 = vmatmul.f32.gmra.mxu0 %v432
    %v716 = vpop.f32.mrf.mxu0
    %v717 = vadd.f32 %v471, %v716
    %718 = vmatmul.f32.gmra.mxu0 %v433
    %v719 = vpop.f32.mrf.mxu0
    %v720 = vadd.f32 %v471, %v719
    %721 = vmatmul.f32.gmra.mxu0 %v434
    %v722 = vpop.f32.mrf.mxu0
    %v723 = vadd.f32 %v471, %v722
    %724 = vmatmul.f32.gmra.mxu0 %v435
    %v725 = vpop.f32.mrf.mxu0
    %v726 = vadd.f32 %v471, %v725
    %727 = vmatmul.f32.gmra.mxu0 %v436
    %v728 = vpop.f32.mrf.mxu0
    %v729 = vadd.f32 %v471, %v728
    %730 = vmatmul.f32.gmra.mxu0 %v437
    %v731 = vpop.f32.mrf.mxu0
    %v732 = vadd.f32 %v471, %v731
    %733 = vdwg.mxu0
    %v734 = vmax.f32 %v490, 0.0
    %v735 = vmax.f32 %v621, 0.0
    %v736 = vmax.f32 %v493, 0.0
    %v737 = vmax.f32 %v624, 0.0
    %v738 = vmax.f32 %v496, 0.0
    %v739 = vmax.f32 %v627, 0.0
    %v740 = vmax.f32 %v499, 0.0
    %v741 = vmax.f32 %v630, 0.0
    %v742 = vmax.f32 %v502, 0.0
    %v743 = vmax.f32 %v633, 0.0
    %v744 = vmax.f32 %v505, 0.0
    %v745 = vmax.f32 %v636, 0.0
    %v746 = vmax.f32 %v508, 0.0
    %v747 = vmax.f32 %v639, 0.0
    %v748 = vmax.f32 %v511, 0.0
    %v749 = vmax.f32 %v642, 0.0
    %v750 = vmax.f32 %v514, 0.0
    %v751 = vmax.f32 %v645, 0.0
    %v752 = vmax.f32 %v517, 0.0
    %v753 = vmax.f32 %v648, 0.0
    %v754 = vmax.f32 %v520, 0.0
    %v755 = vmax.f32 %v651, 0.0
    %v756 = vmax.f32 %v523, 0.0
    %v757 = vmax.f32 %v654, 0.0
    %v758 = vmax.f32 %v526, 0.0
    %v759 = vmax.f32 %v657, 0.0
    %v760 = vmax.f32 %v529, 0.0
    %v761 = vmax.f32 %v660, 0.0
    %v762 = vmax.f32 %v532, 0.0
    %v763 = vmax.f32 %v663, 0.0
    %v764 = vmax.f32 %v535, 0.0
    %v765 = vmax.f32 %v666, 0.0
    %v766 = vmax.f32 %v538, 0.0
    %v767 = vmax.f32 %v669, 0.0
    %v768 = vmax.f32 %v541, 0.0
    %v769 = vmax.f32 %v672, 0.0
    %v770 = vmax.f32 %v544, 0.0
    %v771 = vmax.f32 %v675, 0.0
    %v772 = vmax.f32 %v547, 0.0
    %v773 = vmax.f32 %v678, 0.0
    %v774 = vmax.f32 %v550, 0.0
    %v775 = vmax.f32 %v681, 0.0
    %v776 = vmax.f32 %v553, 0.0
    %v777 = vmax.f32 %v684, 0.0
    %v778 = vmax.f32 %v556, 0.0
    %v779 = vmax.f32 %v687, 0.0
    %v780 = vmax.f32 %v559, 0.0
    %v781 = vmax.f32 %v690, 0.0
    %v782 = vmax.f32 %v562, 0.0
    %v783 = vmax.f32 %v693, 0.0
    %v784 = vmax.f32 %v565, 0.0
    %v785 = vmax.f32 %v696, 0.0
    %v786 = vmax.f32 %v568, 0.0
    %v787 = vmax.f32 %v699, 0.0
    %v788 = vmax.f32 %v571, 0.0
    %v789 = vmax.f32 %v702, 0.0
    %v790 = vmax.f32 %v574, 0.0
    %v791 = vmax.f32 %v705, 0.0
    %v792 = vmax.f32 %v577, 0.0
    %v793 = vmax.f32 %v708, 0.0
    %v794 = vmax.f32 %v580, 0.0
    %v795 = vmax.f32 %v711, 0.0
    %v796 = vmax.f32 %v583, 0.0
    %v797 = vmax.f32 %v714, 0.0
    %v798 = vmax.f32 %v586, 0.0
    %v799 = vmax.f32 %v717, 0.0
    %v800 = vmax.f32 %v589, 0.0
    %v801 = vmax.f32 %v720, 0.0
    %v802 = vmax.f32 %v592, 0.0
    %v803 = vmax.f32 %v723, 0.0
    %v804 = vmax.f32 %v595, 0.0
    %v805 = vmax.f32 %v726, 0.0
    %v806 = vmax.f32 %v598, 0.0
    %v807 = vmax.f32 %v729, 0.0
    %v808 = vmax.f32 %v601, 0.0
    %v809 = vmax.f32 %v732, 0.0
    %v810 = vld [vmem:[#allocation2] sm:$0xff]
    %v811 = vld [vmem:[#allocation2 + $0x8] sm:$0xff]
    %v812 = vld [vmem:[#allocation2 + $0x10] sm:$0xff]
    %v813 = vld [vmem:[#allocation2 + $0x18] sm:$0xff]
    %v814 = vld [vmem:[#allocation2 + $0x20] sm:$0xff]
    %v815 = vld [vmem:[#allocation2 + $0x28] sm:$0xff]
    %v816 = vld [vmem:[#allocation2 + $0x30] sm:$0xff]
    %v817 = vld [vmem:[#allocation2 + $0x38] sm:$0xff]
    %v818 = vld [vmem:[#allocation2 + $0x40] sm:$0xff]
    %v819 = vld [vmem:[#allocation2 + $0x48] sm:$0xff]
    %v820 = vld [vmem:[#allocation2 + $0x50] sm:$0xff]
    %v821 = vld [vmem:[#allocation2 + $0x58] sm:$0xff]
    %v822 = vld [vmem:[#allocation2 + $0x60] sm:$0xff]
    %v823 = vld [vmem:[#allocation2 + $0x68] sm:$0xff]
    %v824 = vld [vmem:[#allocation2 + $0x70] sm:$0xff]
    %v825 = vld [vmem:[#allocation2 + $0x78] sm:$0xff]
    %v826 = vld [vmem:[#allocation2 + $0x80] sm:$0xff]
    %v827 = vld [vmem:[#allocation2 + $0x88] sm:$0xff]
    %v828 = vld [vmem:[#allocation2 + $0x90] sm:$0xff]
    %v829 = vld [vmem:[#allocation2 + $0x98] sm:$0xff]
    %v830 = vld [vmem:[#allocation2 + $0xa0] sm:$0xff]
    %v831 = vld [vmem:[#allocation2 + $0xa8] sm:$0xff]
    %v832 = vld [vmem:[#allocation2 + $0xb0] sm:$0xff]
    %v833 = vld [vmem:[#allocation2 + $0xb8] sm:$0xff]
    %v834 = vld [vmem:[#allocation2 + $0xc0] sm:$0xff]
    %v835 = vld [vmem:[#allocation2 + $0xc8] sm:$0xff]
    %v836 = vld [vmem:[#allocation2 + $0xd0] sm:$0xff]
    %v837 = vld [vmem:[#allocation2 + $0xd8] sm:$0xff]
    %v838 = vld [vmem:[#allocation2 + $0xe0] sm:$0xff]
    %v839 = vld [vmem:[#allocation2 + $0xe8] sm:$0xff]
    %v840 = vld [vmem:[#allocation2 + $0xf0] sm:$0xff]
    %v841 = vld [vmem:[#allocation2 + $0xf8] sm:$0xff]
    %v842 = vld [vmem:[#allocation2 + $0x100] sm:$0xff]
    %v843 = vld [vmem:[#allocation2 + $0x108] sm:$0xff]
    %v844 = vld [vmem:[#allocation2 + $0x110] sm:$0xff]
    %v845 = vld [vmem:[#allocation2 + $0x118] sm:$0xff]
    %v846 = vld [vmem:[#allocation2 + $0x120] sm:$0xff]
    %v847 = vld [vmem:[#allocation2 + $0x128] sm:$0xff]
    %v848 = vld [vmem:[#allocation2 + $0x130] sm:$0xff]
    %v849 = vld [vmem:[#allocation2 + $0x138] sm:$0xff]
    %v850 = vld [vmem:[#allocation2 + $0x140] sm:$0xff]
    %v851 = vld [vmem:[#allocation2 + $0x148] sm:$0xff]
    %v852 = vld [vmem:[#allocation2 + $0x150] sm:$0xff]
    %v853 = vld [vmem:[#allocation2 + $0x158] sm:$0xff]
    %v854 = vld [vmem:[#allocation2 + $0x160] sm:$0xff]
    %v855 = vld [vmem:[#allocation2 + $0x168] sm:$0xff]
    %v856 = vld [vmem:[#allocation2 + $0x170] sm:$0xff]
    %v857 = vld [vmem:[#allocation2 + $0x178] sm:$0xff]
    %v858 = vld [vmem:[#allocation2 + $0x180] sm:$0xff]
    %v859 = vld [vmem:[#allocation2 + $0x188] sm:$0xff]
    %v860 = vld [vmem:[#allocation2 + $0x190] sm:$0xff]
    %v861 = vld [vmem:[#allocation2 + $0x198] sm:$0xff]
    %v862 = vld [vmem:[#allocation2 + $0x1a0] sm:$0xff]
    %v863 = vld [vmem:[#allocation2 + $0x1a8] sm:$0xff]
    %v864 = vld [vmem:[#allocation2 + $0x1b0] sm:$0xff]
    %v865 = vld [vmem:[#allocation2 + $0x1b8] sm:$0xff]
    %v866 = vld [vmem:[#allocation2 + $0x1c0] sm:$0xff]
    %v867 = vld [vmem:[#allocation2 + $0x1c8] sm:$0xff]
    %v868 = vld [vmem:[#allocation2 + $0x1d0] sm:$0xff]
    %v869 = vld [vmem:[#allocation2 + $0x1d8] sm:$0xff]
    %v870 = vld [vmem:[#allocation2 + $0x1e0] sm:$0xff]
    %v871 = vld [vmem:[#allocation2 + $0x1e8] sm:$0xff]
    %v872 = vld [vmem:[#allocation2 + $0x1f0] sm:$0xff]
    %v873 = vld [vmem:[#allocation2 + $0x1f8] sm:$0xff]
    %v874 = vperm.slane %v111, 2
    %v875 = vperm.slane %v112, 2
    %876 = vmatpush.msra.mxu0 %v840
    %877 = vmatpush.msra.mxu0 %v838
    %878 = vmatpush.msra.mxu0 %v836
    %879 = vmatpush.msra.mxu0 %v834
    %880 = vmatpush.msra.mxu0 %v832
    %881 = vmatpush.msra.mxu0 %v830
    %882 = vmatpush.msra.mxu0 %v828
    %883 = vmatpush.msra.mxu0 %v826
    %884 = vmatpush.msra.mxu0 %v824
    %885 = vmatpush.msra.mxu0 %v822
    %886 = vmatpush.msra.mxu0 %v820
    %887 = vmatpush.msra.mxu0 %v818
    %888 = vmatpush.msra.mxu0 %v816
    %889 = vmatpush.msra.mxu0 %v814
    %890 = vmatpush.msra.mxu0 %v812
    %891 = vmatpush.msra.mxu0 %v810
    %892 = vmatmul.f32.gmra.mxu0 %v734
    %v893 = vpop.f32.mrf.mxu0
    %v894 = vadd.f32 %v874, %v893
    %895 = vmatmul.f32.gmra.mxu0 %v736
    %v896 = vpop.f32.mrf.mxu0
    %v897 = vadd.f32 %v874, %v896
    %898 = vmatmul.f32.gmra.mxu0 %v738
    %v899 = vpop.f32.mrf.mxu0
    %v900 = vadd.f32 %v874, %v899
    %901 = vmatmul.f32.gmra.mxu0 %v740
    %v902 = vpop.f32.mrf.mxu0
    %v903 = vadd.f32 %v874, %v902
    %904 = vmatmul.f32.gmra.mxu0 %v742
    %v905 = vpop.f32.mrf.mxu0
    %v906 = vadd.f32 %v874, %v905
    %907 = vmatmul.f32.gmra.mxu0 %v744
    %v908 = vpop.f32.mrf.mxu0
    %v909 = vadd.f32 %v874, %v908
    %910 = vmatmul.f32.gmra.mxu0 %v746
    %v911 = vpop.f32.mrf.mxu0
    %v912 = vadd.f32 %v874, %v911
    %913 = vmatmul.f32.gmra.mxu0 %v748
    %v914 = vpop.f32.mrf.mxu0
    %v915 = vadd.f32 %v874, %v914
    %916 = vmatmul.f32.gmra.mxu0 %v750
    %v917 = vpop.f32.mrf.mxu0
    %v918 = vadd.f32 %v874, %v917
    %919 = vmatmul.f32.gmra.mxu0 %v752
    %v920 = vpop.f32.mrf.mxu0
    %v921 = vadd.f32 %v874, %v920
    %922 = vmatmul.f32.gmra.mxu0 %v754
    %v923 = vpop.f32.mrf.mxu0
    %v924 = vadd.f32 %v874, %v923
    %925 = vmatmul.f32.gmra.mxu0 %v756
    %v926 = vpop.f32.mrf.mxu0
    %v927 = vadd.f32 %v874, %v926
    %928 = vmatmul.f32.gmra.mxu0 %v758
    %v929 = vpop.f32.mrf.mxu0
    %v930 = vadd.f32 %v874, %v929
    %931 = vmatmul.f32.gmra.mxu0 %v760
    %v932 = vpop.f32.mrf.mxu0
    %v933 = vadd.f32 %v874, %v932
    %934 = vmatmul.f32.gmra.mxu0 %v762
    %v935 = vpop.f32.mrf.mxu0
    %v936 = vadd.f32 %v874, %v935
    %937 = vmatmul.f32.gmra.mxu0 %v764
    %v938 = vpop.f32.mrf.mxu0
    %v939 = vadd.f32 %v874, %v938
    %940 = vmatmul.f32.gmra.mxu0 %v766
    %v941 = vpop.f32.mrf.mxu0
    %v942 = vadd.f32 %v874, %v941
    %943 = vmatmul.f32.gmra.mxu0 %v768
    %v944 = vpop.f32.mrf.mxu0
    %v945 = vadd.f32 %v874, %v944
    %946 = vmatmul.f32.gmra.mxu0 %v770
    %v947 = vpop.f32.mrf.mxu0
    %v948 = vadd.f32 %v874, %v947
    %949 = vmatmul.f32.gmra.mxu0 %v772
    %v950 = vpop.f32.mrf.mxu0
    %v951 = vadd.f32 %v874, %v950
    %952 = vmatmul.f32.gmra.mxu0 %v774
    %v953 = vpop.f32.mrf.mxu0
    %v954 = vadd.f32 %v874, %v953
    %955 = vmatmul.f32.gmra.mxu0 %v776
    %v956 = vpop.f32.mrf.mxu0
    %v957 = vadd.f32 %v874, %v956
    %958 = vmatmul.f32.gmra.mxu0 %v778
    %v959 = vpop.f32.mrf.mxu0
    %v960 = vadd.f32 %v874, %v959
    %961 = vmatmul.f32.gmra.mxu0 %v780
    %v962 = vpop.f32.mrf.mxu0
    %v963 = vadd.f32 %v874, %v962
    %964 = vmatmul.f32.gmra.mxu0 %v782
    %v965 = vpop.f32.mrf.mxu0
    %v966 = vadd.f32 %v874, %v965
    %967 = vmatmul.f32.gmra.mxu0 %v784
    %v968 = vpop.f32.mrf.mxu0
    %v969 = vadd.f32 %v874, %v968
    %970 = vmatmul.f32.gmra.mxu0 %v786
    %v971 = vpop.f32.mrf.mxu0
    %v972 = vadd.f32 %v874, %v971
    %973 = vmatmul.f32.gmra.mxu0 %v788
    %v974 = vpop.f32.mrf.mxu0
    %v975 = vadd.f32 %v874, %v974
    %976 = vmatmul.f32.gmra.mxu0 %v790
    %v977 = vpop.f32.mrf.mxu0
    %v978 = vadd.f32 %v874, %v977
    %979 = vmatmul.f32.gmra.mxu0 %v792
    %v980 = vpop.f32.mrf.mxu0
    %v981 = vadd.f32 %v874, %v980
    %982 = vmatmul.f32.gmra.mxu0 %v794
    %v983 = vpop.f32.mrf.mxu0
    %v984 = vadd.f32 %v874, %v983
    %985 = vmatmul.f32.gmra.mxu0 %v796
    %v986 = vpop.f32.mrf.mxu0
    %v987 = vadd.f32 %v874, %v986
    %988 = vmatmul.f32.gmra.mxu0 %v798
    %v989 = vpop.f32.mrf.mxu0
    %v990 = vadd.f32 %v874, %v989
    %991 = vmatmul.f32.gmra.mxu0 %v800
    %v992 = vpop.f32.mrf.mxu0
    %v993 = vadd.f32 %v874, %v992
    %994 = vmatmul.f32.gmra.mxu0 %v802
    %v995 = vpop.f32.mrf.mxu0
    %v996 = vadd.f32 %v874, %v995
    %997 = vmatmul.f32.gmra.mxu0 %v804
    %v998 = vpop.f32.mrf.mxu0
    %v999 = vadd.f32 %v874, %v998
    %1000 = vmatmul.f32.gmra.mxu0 %v806
    %v1001 = vpop.f32.mrf.mxu0
    %v1002 = vadd.f32 %v874, %v1001
    %1003 = vmatmul.f32.gmra.mxu0 %v808
    %v1004 = vpop.f32.mrf.mxu0
    %v1005 = vadd.f32 %v874, %v1004
    %1006 = vdwg.mxu0
    %1007 = vmatpush.msra.mxu0 %v872
    %1008 = vmatpush.msra.mxu0 %v870
    %1009 = vmatpush.msra.mxu0 %v868
    %1010 = vmatpush.msra.mxu0 %v866
    %1011 = vmatpush.msra.mxu0 %v864
    %1012 = vmatpush.msra.mxu0 %v862
    %1013 = vmatpush.msra.mxu0 %v860
    %1014 = vmatpush.msra.mxu0 %v858
    %1015 = vmatpush.msra.mxu0 %v856
    %1016 = vmatpush.msra.mxu0 %v854
    %1017 = vmatpush.msra.mxu0 %v852
    %1018 = vmatpush.msra.mxu0 %v850
    %1019 = vmatpush.msra.mxu0 %v848
    %1020 = vmatpush.msra.mxu0 %v846
    %1021 = vmatpush.msra.mxu0 %v844
    %1022 = vmatpush.msra.mxu0 %v842
    %1023 = vmatmul.f32.gmra.mxu0 %v735
    %v1024 = vpop.f32.mrf.mxu0
    %v1025 = vadd.f32 %v894, %v1024
    %1026 = vmatmul.f32.gmra.mxu0 %v737
    %v1027 = vpop.f32.mrf.mxu0
    %v1028 = vadd.f32 %v897, %v1027
    %1029 = vmatmul.f32.gmra.mxu0 %v739
    %v1030 = vpop.f32.mrf.mxu0
    %v1031 = vadd.f32 %v900, %v1030
    %1032 = vmatmul.f32.gmra.mxu0 %v741
    %v1033 = vpop.f32.mrf.mxu0
    %v1034 = vadd.f32 %v903, %v1033
    %1035 = vmatmul.f32.gmra.mxu0 %v743
    %v1036 = vpop.f32.mrf.mxu0
    %v1037 = vadd.f32 %v906, %v1036
    %1038 = vmatmul.f32.gmra.mxu0 %v745
    %v1039 = vpop.f32.mrf.mxu0
    %v1040 = vadd.f32 %v909, %v1039
    %1041 = vmatmul.f32.gmra.mxu0 %v747
    %v1042 = vpop.f32.mrf.mxu0
    %v1043 = vadd.f32 %v912, %v1042
    %1044 = vmatmul.f32.gmra.mxu0 %v749
    %v1045 = vpop.f32.mrf.mxu0
    %v1046 = vadd.f32 %v915, %v1045
    %1047 = vmatmul.f32.gmra.mxu0 %v751
    %v1048 = vpop.f32.mrf.mxu0
    %v1049 = vadd.f32 %v918, %v1048
    %1050 = vmatmul.f32.gmra.mxu0 %v753
    %v1051 = vpop.f32.mrf.mxu0
    %v1052 = vadd.f32 %v921, %v1051
    %1053 = vmatmul.f32.gmra.mxu0 %v755
    %v1054 = vpop.f32.mrf.mxu0
    %v1055 = vadd.f32 %v924, %v1054
    %1056 = vmatmul.f32.gmra.mxu0 %v757
    %v1057 = vpop.f32.mrf.mxu0
    %v1058 = vadd.f32 %v927, %v1057
    %1059 = vmatmul.f32.gmra.mxu0 %v759
    %v1060 = vpop.f32.mrf.mxu0
    %v1061 = vadd.f32 %v930, %v1060
    %1062 = vmatmul.f32.gmra.mxu0 %v761
    %v1063 = vpop.f32.mrf.mxu0
    %v1064 = vadd.f32 %v933, %v1063
    %1065 = vmatmul.f32.gmra.mxu0 %v763
    %v1066 = vpop.f32.mrf.mxu0
    %v1067 = vadd.f32 %v936, %v1066
    %1068 = vmatmul.f32.gmra.mxu0 %v765
    %v1069 = vpop.f32.mrf.mxu0
    %v1070 = vadd.f32 %v939, %v1069
    %1071 = vmatmul.f32.gmra.mxu0 %v767
    %v1072 = vpop.f32.mrf.mxu0
    %v1073 = vadd.f32 %v942, %v1072
    %1074 = vmatmul.f32.gmra.mxu0 %v769
    %v1075 = vpop.f32.mrf.mxu0
    %v1076 = vadd.f32 %v945, %v1075
    %1077 = vmatmul.f32.gmra.mxu0 %v771
    %v1078 = vpop.f32.mrf.mxu0
    %v1079 = vadd.f32 %v948, %v1078
    %1080 = vmatmul.f32.gmra.mxu0 %v773
    %v1081 = vpop.f32.mrf.mxu0
    %v1082 = vadd.f32 %v951, %v1081
    %1083 = vmatmul.f32.gmra.mxu0 %v775
    %v1084 = vpop.f32.mrf.mxu0
    %v1085 = vadd.f32 %v954, %v1084
    %1086 = vmatmul.f32.gmra.mxu0 %v777
    %v1087 = vpop.f32.mrf.mxu0
    %v1088 = vadd.f32 %v957, %v1087
    %1089 = vmatmul.f32.gmra.mxu0 %v779
    %v1090 = vpop.f32.mrf.mxu0
    %v1091 = vadd.f32 %v960, %v1090
    %1092 = vmatmul.f32.gmra.mxu0 %v781
    %v1093 = vpop.f32.mrf.mxu0
    %v1094 = vadd.f32 %v963, %v1093
    %1095 = vmatmul.f32.gmra.mxu0 %v783
    %v1096 = vpop.f32.mrf.mxu0
    %v1097 = vadd.f32 %v966, %v1096
    %1098 = vmatmul.f32.gmra.mxu0 %v785
    %v1099 = vpop.f32.mrf.mxu0
    %v1100 = vadd.f32 %v969, %v1099
    %1101 = vmatmul.f32.gmra.mxu0 %v787
    %v1102 = vpop.f32.mrf.mxu0
    %v1103 = vadd.f32 %v972, %v1102
    %1104 = vmatmul.f32.gmra.mxu0 %v789
    %v1105 = vpop.f32.mrf.mxu0
    %v1106 = vadd.f32 %v975, %v1105
    %1107 = vmatmul.f32.gmra.mxu0 %v791
    %v1108 = vpop.f32.mrf.mxu0
    %v1109 = vadd.f32 %v978, %v1108
    %1110 = vmatmul.f32.gmra.mxu0 %v793
    %v1111 = vpop.f32.mrf.mxu0
    %v1112 = vadd.f32 %v981, %v1111
    %1113 = vmatmul.f32.gmra.mxu0 %v795
    %v1114 = vpop.f32.mrf.mxu0
    %v1115 = vadd.f32 %v984, %v1114
    %1116 = vmatmul.f32.gmra.mxu0 %v797
    %v1117 = vpop.f32.mrf.mxu0
    %v1118 = vadd.f32 %v987, %v1117
    %1119 = vmatmul.f32.gmra.mxu0 %v799
    %v1120 = vpop.f32.mrf.mxu0
    %v1121 = vadd.f32 %v990, %v1120
    %1122 = vmatmul.f32.gmra.mxu0 %v801
    %v1123 = vpop.f32.mrf.mxu0
    %v1124 = vadd.f32 %v993, %v1123
    %1125 = vmatmul.f32.gmra.mxu0 %v803
    %v1126 = vpop.f32.mrf.mxu0
    %v1127 = vadd.f32 %v996, %v1126
    %1128 = vmatmul.f32.gmra.mxu0 %v805
    %v1129 = vpop.f32.mrf.mxu0
    %v1130 = vadd.f32 %v999, %v1129
    %1131 = vmatmul.f32.gmra.mxu0 %v807
    %v1132 = vpop.f32.mrf.mxu0
    %v1133 = vadd.f32 %v1002, %v1132
    %1134 = vmatmul.f32.gmra.mxu0 %v809
    %v1135 = vpop.f32.mrf.mxu0
    %v1136 = vadd.f32 %v1005, %v1135
    %1137 = vdwg.mxu0
    %1138 = vmatpush.msra.mxu0 %v841
    %1139 = vmatpush.msra.mxu0 %v839
    %1140 = vmatpush.msra.mxu0 %v837
    %1141 = vmatpush.msra.mxu0 %v835
    %1142 = vmatpush.msra.mxu0 %v833
    %1143 = vmatpush.msra.mxu0 %v831
    %1144 = vmatpush.msra.mxu0 %v829
    %1145 = vmatpush.msra.mxu0 %v827
    %1146 = vmatpush.msra.mxu0 %v825
    %1147 = vmatpush.msra.mxu0 %v823
    %1148 = vmatpush.msra.mxu0 %v821
    %1149 = vmatpush.msra.mxu0 %v819
    %1150 = vmatpush.msra.mxu0 %v817
    %1151 = vmatpush.msra.mxu0 %v815
    %1152 = vmatpush.msra.mxu0 %v813
    %1153 = vmatpush.msra.mxu0 %v811
    %1154 = vmatmul.f32.gmra.mxu0 %v734
    %v1155 = vpop.f32.mrf.mxu0
    %v1156 = vadd.f32 %v875, %v1155
    %1157 = vmatmul.f32.gmra.mxu0 %v736
    %v1158 = vpop.f32.mrf.mxu0
    %v1159 = vadd.f32 %v875, %v1158
    %1160 = vmatmul.f32.gmra.mxu0 %v738
    %v1161 = vpop.f32.mrf.mxu0
    %v1162 = vadd.f32 %v875, %v1161
    %1163 = vmatmul.f32.gmra.mxu0 %v740
    %v1164 = vpop.f32.mrf.mxu0
    %v1165 = vadd.f32 %v875, %v1164
    %1166 = vmatmul.f32.gmra.mxu0 %v742
    %v1167 = vpop.f32.mrf.mxu0
    %v1168 = vadd.f32 %v875, %v1167
    %1169 = vmatmul.f32.gmra.mxu0 %v744
    %v1170 = vpop.f32.mrf.mxu0
    %v1171 = vadd.f32 %v875, %v1170
    %1172 = vmatmul.f32.gmra.mxu0 %v746
    %v1173 = vpop.f32.mrf.mxu0
    %v1174 = vadd.f32 %v875, %v1173
    %1175 = vmatmul.f32.gmra.mxu0 %v748
    %v1176 = vpop.f32.mrf.mxu0
    %v1177 = vadd.f32 %v875, %v1176
    %1178 = vmatmul.f32.gmra.mxu0 %v750
    %v1179 = vpop.f32.mrf.mxu0
    %v1180 = vadd.f32 %v875, %v1179
    %1181 = vmatmul.f32.gmra.mxu0 %v752
    %v1182 = vpop.f32.mrf.mxu0
    %v1183 = vadd.f32 %v875, %v1182
    %1184 = vmatmul.f32.gmra.mxu0 %v754
    %v1185 = vpop.f32.mrf.mxu0
    %v1186 = vadd.f32 %v875, %v1185
    %1187 = vmatmul.f32.gmra.mxu0 %v756
    %v1188 = vpop.f32.mrf.mxu0
    %v1189 = vadd.f32 %v875, %v1188
    %1190 = vmatmul.f32.gmra.mxu0 %v758
    %v1191 = vpop.f32.mrf.mxu0
    %v1192 = vadd.f32 %v875, %v1191
    %1193 = vmatmul.f32.gmra.mxu0 %v760
    %v1194 = vpop.f32.mrf.mxu0
    %v1195 = vadd.f32 %v875, %v1194
    %1196 = vmatmul.f32.gmra.mxu0 %v762
    %v1197 = vpop.f32.mrf.mxu0
    %v1198 = vadd.f32 %v875, %v1197
    %1199 = vmatmul.f32.gmra.mxu0 %v764
    %v1200 = vpop.f32.mrf.mxu0
    %v1201 = vadd.f32 %v875, %v1200
    %1202 = vmatmul.f32.gmra.mxu0 %v766
    %v1203 = vpop.f32.mrf.mxu0
    %v1204 = vadd.f32 %v875, %v1203
    %1205 = vmatmul.f32.gmra.mxu0 %v768
    %v1206 = vpop.f32.mrf.mxu0
    %v1207 = vadd.f32 %v875, %v1206
    %1208 = vmatmul.f32.gmra.mxu0 %v770
    %v1209 = vpop.f32.mrf.mxu0
    %v1210 = vadd.f32 %v875, %v1209
    %1211 = vmatmul.f32.gmra.mxu0 %v772
    %v1212 = vpop.f32.mrf.mxu0
    %v1213 = vadd.f32 %v875, %v1212
    %1214 = vmatmul.f32.gmra.mxu0 %v774
    %v1215 = vpop.f32.mrf.mxu0
    %v1216 = vadd.f32 %v875, %v1215
    %1217 = vmatmul.f32.gmra.mxu0 %v776
    %v1218 = vpop.f32.mrf.mxu0
    %v1219 = vadd.f32 %v875, %v1218
    %1220 = vmatmul.f32.gmra.mxu0 %v778
    %v1221 = vpop.f32.mrf.mxu0
    %v1222 = vadd.f32 %v875, %v1221
    %1223 = vmatmul.f32.gmra.mxu0 %v780
    %v1224 = vpop.f32.mrf.mxu0
    %v1225 = vadd.f32 %v875, %v1224
    %1226 = vmatmul.f32.gmra.mxu0 %v782
    %v1227 = vpop.f32.mrf.mxu0
    %v1228 = vadd.f32 %v875, %v1227
    %1229 = vmatmul.f32.gmra.mxu0 %v784
    %v1230 = vpop.f32.mrf.mxu0
    %v1231 = vadd.f32 %v875, %v1230
    %1232 = vmatmul.f32.gmra.mxu0 %v786
    %v1233 = vpop.f32.mrf.mxu0
    %v1234 = vadd.f32 %v875, %v1233
    %1235 = vmatmul.f32.gmra.mxu0 %v788
    %v1236 = vpop.f32.mrf.mxu0
    %v1237 = vadd.f32 %v875, %v1236
    %1238 = vmatmul.f32.gmra.mxu0 %v790
    %v1239 = vpop.f32.mrf.mxu0
    %v1240 = vadd.f32 %v875, %v1239
    %1241 = vmatmul.f32.gmra.mxu0 %v792
    %v1242 = vpop.f32.mrf.mxu0
    %v1243 = vadd.f32 %v875, %v1242
    %1244 = vmatmul.f32.gmra.mxu0 %v794
    %v1245 = vpop.f32.mrf.mxu0
    %v1246 = vadd.f32 %v875, %v1245
    %1247 = vmatmul.f32.gmra.mxu0 %v796
    %v1248 = vpop.f32.mrf.mxu0
    %v1249 = vadd.f32 %v875, %v1248
    %1250 = vmatmul.f32.gmra.mxu0 %v798
    %v1251 = vpop.f32.mrf.mxu0
    %v1252 = vadd.f32 %v875, %v1251
    %1253 = vmatmul.f32.gmra.mxu0 %v800
    %v1254 = vpop.f32.mrf.mxu0
    %v1255 = vadd.f32 %v875, %v1254
    %1256 = vmatmul.f32.gmra.mxu0 %v802
    %v1257 = vpop.f32.mrf.mxu0
    %v1258 = vadd.f32 %v875, %v1257
    %1259 = vmatmul.f32.gmra.mxu0 %v804
    %v1260 = vpop.f32.mrf.mxu0
    %v1261 = vadd.f32 %v875, %v1260
    %1262 = vmatmul.f32.gmra.mxu0 %v806
    %v1263 = vpop.f32.mrf.mxu0
    %v1264 = vadd.f32 %v875, %v1263
    %1265 = vmatmul.f32.gmra.mxu0 %v808
    %v1266 = vpop.f32.mrf.mxu0
    %v1267 = vadd.f32 %v875, %v1266
    %1268 = vdwg.mxu0
    %1269 = vmatpush.msra.mxu0 %v873
    %1270 = vmatpush.msra.mxu0 %v871
    %1271 = vmatpush.msra.mxu0 %v869
    %1272 = vmatpush.msra.mxu0 %v867
    %1273 = vmatpush.msra.mxu0 %v865
    %1274 = vmatpush.msra.mxu0 %v863
    %1275 = vmatpush.msra.mxu0 %v861
    %1276 = vmatpush.msra.mxu0 %v859
    %1277 = vmatpush.msra.mxu0 %v857
    %1278 = vmatpush.msra.mxu0 %v855
    %1279 = vmatpush.msra.mxu0 %v853
    %1280 = vmatpush.msra.mxu0 %v851
    %1281 = vmatpush.msra.mxu0 %v849
    %1282 = vmatpush.msra.mxu0 %v847
    %1283 = vmatpush.msra.mxu0 %v845
    %1284 = vmatpush.msra.mxu0 %v843
    %1285 = vmatmul.f32.gmra.mxu0 %v735
    %v1286 = vpop.f32.mrf.mxu0
    %v1287 = vadd.f32 %v1156, %v1286
    %1288 = vmatmul.f32.gmra.mxu0 %v737
    %v1289 = vpop.f32.mrf.mxu0
    %v1290 = vadd.f32 %v1159, %v1289
    %1291 = vmatmul.f32.gmra.mxu0 %v739
    %v1292 = vpop.f32.mrf.mxu0
    %v1293 = vadd.f32 %v1162, %v1292
    %1294 = vmatmul.f32.gmra.mxu0 %v741
    %v1295 = vpop.f32.mrf.mxu0
    %v1296 = vadd.f32 %v1165, %v1295
    %1297 = vmatmul.f32.gmra.mxu0 %v743
    %v1298 = vpop.f32.mrf.mxu0
    %v1299 = vadd.f32 %v1168, %v1298
    %1300 = vmatmul.f32.gmra.mxu0 %v745
    %v1301 = vpop.f32.mrf.mxu0
    %v1302 = vadd.f32 %v1171, %v1301
    %1303 = vmatmul.f32.gmra.mxu0 %v747
    %v1304 = vpop.f32.mrf.mxu0
    %v1305 = vadd.f32 %v1174, %v1304
    %1306 = vmatmul.f32.gmra.mxu0 %v749
    %v1307 = vpop.f32.mrf.mxu0
    %v1308 = vadd.f32 %v1177, %v1307
    %1309 = vmatmul.f32.gmra.mxu0 %v751
    %v1310 = vpop.f32.mrf.mxu0
    %v1311 = vadd.f32 %v1180, %v1310
    %1312 = vmatmul.f32.gmra.mxu0 %v753
    %v1313 = vpop.f32.mrf.mxu0
    %v1314 = vadd.f32 %v1183, %v1313
    %1315 = vmatmul.f32.gmra.mxu0 %v755
    %v1316 = vpop.f32.mrf.mxu0
    %v1317 = vadd.f32 %v1186, %v1316
    %1318 = vmatmul.f32.gmra.mxu0 %v757
    %v1319 = vpop.f32.mrf.mxu0
    %v1320 = vadd.f32 %v1189, %v1319
    %1321 = vmatmul.f32.gmra.mxu0 %v759
    %v1322 = vpop.f32.mrf.mxu0
    %v1323 = vadd.f32 %v1192, %v1322
    %1324 = vmatmul.f32.gmra.mxu0 %v761
    %v1325 = vpop.f32.mrf.mxu0
    %v1326 = vadd.f32 %v1195, %v1325
    %1327 = vmatmul.f32.gmra.mxu0 %v763
    %v1328 = vpop.f32.mrf.mxu0
    %v1329 = vadd.f32 %v1198, %v1328
    %1330 = vmatmul.f32.gmra.mxu0 %v765
    %v1331 = vpop.f32.mrf.mxu0
    %v1332 = vadd.f32 %v1201, %v1331
    %1333 = vmatmul.f32.gmra.mxu0 %v767
    %v1334 = vpop.f32.mrf.mxu0
    %v1335 = vadd.f32 %v1204, %v1334
    %1336 = vmatmul.f32.gmra.mxu0 %v769
    %v1337 = vpop.f32.mrf.mxu0
    %v1338 = vadd.f32 %v1207, %v1337
    %1339 = vmatmul.f32.gmra.mxu0 %v771
    %v1340 = vpop.f32.mrf.mxu0
    %v1341 = vadd.f32 %v1210, %v1340
    %1342 = vmatmul.f32.gmra.mxu0 %v773
    %v1343 = vpop.f32.mrf.mxu0
    %v1344 = vadd.f32 %v1213, %v1343
    %1345 = vmatmul.f32.gmra.mxu0 %v775
    %v1346 = vpop.f32.mrf.mxu0
    %v1347 = vadd.f32 %v1216, %v1346
    %1348 = vmatmul.f32.gmra.mxu0 %v777
    %v1349 = vpop.f32.mrf.mxu0
    %v1350 = vadd.f32 %v1219, %v1349
    %1351 = vmatmul.f32.gmra.mxu0 %v779
    %v1352 = vpop.f32.mrf.mxu0
    %v1353 = vadd.f32 %v1222, %v1352
    %1354 = vmatmul.f32.gmra.mxu0 %v781
    %v1355 = vpop.f32.mrf.mxu0
    %v1356 = vadd.f32 %v1225, %v1355
    %1357 = vmatmul.f32.gmra.mxu0 %v783
    %v1358 = vpop.f32.mrf.mxu0
    %v1359 = vadd.f32 %v1228, %v1358
    %1360 = vmatmul.f32.gmra.mxu0 %v785
    %v1361 = vpop.f32.mrf.mxu0
    %v1362 = vadd.f32 %v1231, %v1361
    %1363 = vmatmul.f32.gmra.mxu0 %v787
    %v1364 = vpop.f32.mrf.mxu0
    %v1365 = vadd.f32 %v1234, %v1364
    %1366 = vmatmul.f32.gmra.mxu0 %v789
    %v1367 = vpop.f32.mrf.mxu0
    %v1368 = vadd.f32 %v1237, %v1367
    %1369 = vmatmul.f32.gmra.mxu0 %v791
    %v1370 = vpop.f32.mrf.mxu0
    %v1371 = vadd.f32 %v1240, %v1370
    %1372 = vmatmul.f32.gmra.mxu0 %v793
    %v1373 = vpop.f32.mrf.mxu0
    %v1374 = vadd.f32 %v1243, %v1373
    %1375 = vmatmul.f32.gmra.mxu0 %v795
    %v1376 = vpop.f32.mrf.mxu0
    %v1377 = vadd.f32 %v1246, %v1376
    %1378 = vmatmul.f32.gmra.mxu0 %v797
    %v1379 = vpop.f32.mrf.mxu0
    %v1380 = vadd.f32 %v1249, %v1379
    %1381 = vmatmul.f32.gmra.mxu0 %v799
    %v1382 = vpop.f32.mrf.mxu0
    %v1383 = vadd.f32 %v1252, %v1382
    %1384 = vmatmul.f32.gmra.mxu0 %v801
    %v1385 = vpop.f32.mrf.mxu0
    %v1386 = vadd.f32 %v1255, %v1385
    %1387 = vmatmul.f32.gmra.mxu0 %v803
    %v1388 = vpop.f32.mrf.mxu0
    %v1389 = vadd.f32 %v1258, %v1388
    %1390 = vmatmul.f32.gmra.mxu0 %v805
    %v1391 = vpop.f32.mrf.mxu0
    %v1392 = vadd.f32 %v1261, %v1391
    %1393 = vmatmul.f32.gmra.mxu0 %v807
    %v1394 = vpop.f32.mrf.mxu0
    %v1395 = vadd.f32 %v1264, %v1394
    %1396 = vmatmul.f32.gmra.mxu0 %v809
    %v1397 = vpop.f32.mrf.mxu0
    %v1398 = vadd.f32 %v1267, %v1397
    %1399 = vdwg.mxu0
    %v1400 = vtanh.pop %v1025
    %v1401 = vtanh.pop %v1287
    %v1402 = vtanh.pop %v1028
    %v1403 = vtanh.pop %v1290
    %v1404 = vtanh.pop %v1031
    %v1405 = vtanh.pop %v1293
    %v1406 = vtanh.pop %v1034
    %v1407 = vtanh.pop %v1296
    %v1408 = vtanh.pop %v1037
    %v1409 = vtanh.pop %v1299
    %v1410 = vtanh.pop %v1040
    %v1411 = vtanh.pop %v1302
    %v1412 = vtanh.pop %v1043
    %v1413 = vtanh.pop %v1305
    %v1414 = vtanh.pop %v1046
    %v1415 = vtanh.pop %v1308
    %v1416 = vtanh.pop %v1049
    %v1417 = vtanh.pop %v1311
    %v1418 = vtanh.pop %v1052
    %v1419 = vtanh.pop %v1314
    %v1420 = vtanh.pop %v1055
    %v1421 = vtanh.pop %v1317
    %v1422 = vtanh.pop %v1058
    %v1423 = vtanh.pop %v1320
    %v1424 = vtanh.pop %v1061
    %v1425 = vtanh.pop %v1323
    %v1426 = vtanh.pop %v1064
    %v1427 = vtanh.pop %v1326
    %v1428 = vtanh.pop %v1067
    %v1429 = vtanh.pop %v1329
    %v1430 = vtanh.pop %v1070
    %v1431 = vtanh.pop %v1332
    %v1432 = vtanh.pop %v1073
    %v1433 = vtanh.pop %v1335
    %v1434 = vtanh.pop %v1076
    %v1435 = vtanh.pop %v1338
    %v1436 = vtanh.pop %v1079
    %v1437 = vtanh.pop %v1341
    %v1438 = vtanh.pop %v1082
    %v1439 = vtanh.pop %v1344
    %v1440 = vtanh.pop %v1085
    %v1441 = vtanh.pop %v1347
    %v1442 = vtanh.pop %v1088
    %v1443 = vtanh.pop %v1350
    %v1444 = vtanh.pop %v1091
    %v1445 = vtanh.pop %v1353
    %v1446 = vtanh.pop %v1094
    %v1447 = vtanh.pop %v1356
    %v1448 = vtanh.pop %v1097
    %v1449 = vtanh.pop %v1359
    %v1450 = vtanh.pop %v1100
    %v1451 = vtanh.pop %v1362
    %v1452 = vtanh.pop %v1103
    %v1453 = vtanh.pop %v1365
    %v1454 = vtanh.pop %v1106
    %v1455 = vtanh.pop %v1368
    %v1456 = vtanh.pop %v1109
    %v1457 = vtanh.pop %v1371
    %v1458 = vtanh.pop %v1112
    %v1459 = vtanh.pop %v1374
    %v1460 = vtanh.pop %v1115
    %v1461 = vtanh.pop %v1377
    %v1462 = vtanh.pop %v1118
    %v1463 = vtanh.pop %v1380
    %v1464 = vtanh.pop %v1121
    %v1465 = vtanh.pop %v1383
    %v1466 = vtanh.pop %v1124
    %v1467 = vtanh.pop %v1386
    %v1468 = vtanh.pop %v1127
    %v1469 = vtanh.pop %v1389
    %v1470 = vtanh.pop %v1130
    %v1471 = vtanh.pop %v1392
    %v1472 = vtanh.pop %v1133
    %v1473 = vtanh.pop %v1395
    %v1474 = vtanh.pop %v1136
    %v1475 = vtanh.pop %v1398
    %v1476 = vld [vmem:[#allocation5] sm:$0xff]
    %v1477 = vld [vmem:[#allocation5 + $0x8] sm:$0xff]
    %v1478 = vld [vmem:[#allocation5 + $0x10] sm:$0xff]
    %v1479 = vld [vmem:[#allocation5 + $0x18] sm:$0xff]
    %v1480 = vld [vmem:[#allocation5 + $0x20] sm:$0xff]
    %v1481 = vld [vmem:[#allocation5 + $0x28] sm:$0xff]
    %v1482 = vld [vmem:[#allocation5 + $0x30] sm:$0xff]
    %v1483 = vld [vmem:[#allocation5 + $0x38] sm:$0xff]
    %v1484 = vld [vmem:[#allocation5 + $0x40] sm:$0xff]
    %v1485 = vld [vmem:[#allocation5 + $0x48] sm:$0xff]
    %v1486 = vld [vmem:[#allocation5 + $0x50] sm:$0xff]
    %v1487 = vld [vmem:[#allocation5 + $0x58] sm:$0xff]
    %v1488 = vld [vmem:[#allocation5 + $0x60] sm:$0xff]
    %v1489 = vld [vmem:[#allocation5 + $0x68] sm:$0xff]
    %v1490 = vld [vmem:[#allocation5 + $0x70] sm:$0xff]
    %v1491 = vld [vmem:[#allocation5 + $0x78] sm:$0xff]
    %v1492 = vld [vmem:[#allocation5 + $0x80] sm:$0xff]
    %v1493 = vld [vmem:[#allocation5 + $0x88] sm:$0xff]
    %v1494 = vld [vmem:[#allocation5 + $0x90] sm:$0xff]
    %v1495 = vld [vmem:[#allocation5 + $0x98] sm:$0xff]
    %v1496 = vld [vmem:[#allocation5 + $0xa0] sm:$0xff]
    %v1497 = vld [vmem:[#allocation5 + $0xa8] sm:$0xff]
    %v1498 = vld [vmem:[#allocation5 + $0xb0] sm:$0xff]
    %v1499 = vld [vmem:[#allocation5 + $0xb8] sm:$0xff]
    %v1500 = vld [vmem:[#allocation5 + $0xc0] sm:$0xff]
    %v1501 = vld [vmem:[#allocation5 + $0xc8] sm:$0xff]
    %v1502 = vld [vmem:[#allocation5 + $0xd0] sm:$0xff]
    %v1503 = vld [vmem:[#allocation5 + $0xd8] sm:$0xff]
    %v1504 = vld [vmem:[#allocation5 + $0xe0] sm:$0xff]
    %v1505 = vld [vmem:[#allocation5 + $0xe8] sm:$0xff]
    %v1506 = vld [vmem:[#allocation5 + $0xf0] sm:$0xff]
    %v1507 = vld [vmem:[#allocation5 + $0xf8] sm:$0xff]
    %v1508 = vperm.slane %v111, 3
    %1509 = vmatpush.msra.mxu0 %v1491
    %1510 = vmatpush.msra.mxu0 %v1490
    %1511 = vmatpush.msra.mxu0 %v1489
    %1512 = vmatpush.msra.mxu0 %v1488
    %1513 = vmatpush.msra.mxu0 %v1487
    %1514 = vmatpush.msra.mxu0 %v1486
    %1515 = vmatpush.msra.mxu0 %v1485
    %1516 = vmatpush.msra.mxu0 %v1484
    %1517 = vmatpush.msra.mxu0 %v1483
    %1518 = vmatpush.msra.mxu0 %v1482
    %1519 = vmatpush.msra.mxu0 %v1481
    %1520 = vmatpush.msra.mxu0 %v1480
    %1521 = vmatpush.msra.mxu0 %v1479
    %1522 = vmatpush.msra.mxu0 %v1478
    %1523 = vmatpush.msra.mxu0 %v1477
    %1524 = vmatpush.msra.mxu0 %v1476
    %1525 = vmatmul.f32.gmra.mxu0 %v1400
    %v1526 = vpop.f32.mrf.mxu0
    %v1527 = vadd.f32 %v1508, %v1526
    %1528 = vmatmul.f32.gmra.mxu0 %v1402
    %v1529 = vpop.f32.mrf.mxu0
    %v1530 = vadd.f32 %v1508, %v1529
    %1531 = vmatmul.f32.gmra.mxu0 %v1404
    %v1532 = vpop.f32.mrf.mxu0
    %v1533 = vadd.f32 %v1508, %v1532
    %1534 = vmatmul.f32.gmra.mxu0 %v1406
    %v1535 = vpop.f32.mrf.mxu0
    %v1536 = vadd.f32 %v1508, %v1535
    %1537 = vmatmul.f32.gmra.mxu0 %v1408
    %v1538 = vpop.f32.mrf.mxu0
    %v1539 = vadd.f32 %v1508, %v1538
    %1540 = vmatmul.f32.gmra.mxu0 %v1410
    %v1541 = vpop.f32.mrf.mxu0
    %v1542 = vadd.f32 %v1508, %v1541
    %1543 = vmatmul.f32.gmra.mxu0 %v1412
    %v1544 = vpop.f32.mrf.mxu0
    %v1545 = vadd.f32 %v1508, %v1544
    %1546 = vmatmul.f32.gmra.mxu0 %v1414
    %v1547 = vpop.f32.mrf.mxu0
    %v1548 = vadd.f32 %v1508, %v1547
    %1549 = vmatmul.f32.gmra.mxu0 %v1416
    %v1550 = vpop.f32.mrf.mxu0
    %v1551 = vadd.f32 %v1508, %v1550
    %1552 = vmatmul.f32.gmra.mxu0 %v1418
    %v1553 = vpop.f32.mrf.mxu0
    %v1554 = vadd.f32 %v1508, %v1553
    %1555 = vmatmul.f32.gmra.mxu0 %v1420
    %v1556 = vpop.f32.mrf.mxu0
    %v1557 = vadd.f32 %v1508, %v1556
    %1558 = vmatmul.f32.gmra.mxu0 %v1422
    %v1559 = vpop.f32.mrf.mxu0
    %v1560 = vadd.f32 %v1508, %v1559
    %1561 = vmatmul.f32.gmra.mxu0 %v1424
    %v1562 = vpop.f32.mrf.mxu0
    %v1563 = vadd.f32 %v1508, %v1562
    %1564 = vmatmul.f32.gmra.mxu0 %v1426
    %v1565 = vpop.f32.mrf.mxu0
    %v1566 = vadd.f32 %v1508, %v1565
    %1567 = vmatmul.f32.gmra.mxu0 %v1428
    %v1568 = vpop.f32.mrf.mxu0
    %v1569 = vadd.f32 %v1508, %v1568
    %1570 = vmatmul.f32.gmra.mxu0 %v1430
    %v1571 = vpop.f32.mrf.mxu0
    %v1572 = vadd.f32 %v1508, %v1571
    %1573 = vmatmul.f32.gmra.mxu0 %v1432
    %v1574 = vpop.f32.mrf.mxu0
    %v1575 = vadd.f32 %v1508, %v1574
    %1576 = vmatmul.f32.gmra.mxu0 %v1434
    %v1577 = vpop.f32.mrf.mxu0
    %v1578 = vadd.f32 %v1508, %v1577
    %1579 = vmatmul.f32.gmra.mxu0 %v1436
    %v1580 = vpop.f32.mrf.mxu0
    %v1581 = vadd.f32 %v1508, %v1580
    %1582 = vmatmul.f32.gmra.mxu0 %v1438
    %v1583 = vpop.f32.mrf.mxu0
    %v1584 = vadd.f32 %v1508, %v1583
    %1585 = vmatmul.f32.gmra.mxu0 %v1440
    %v1586 = vpop.f32.mrf.mxu0
    %v1587 = vadd.f32 %v1508, %v1586
    %1588 = vmatmul.f32.gmra.mxu0 %v1442
    %v1589 = vpop.f32.mrf.mxu0
    %v1590 = vadd.f32 %v1508, %v1589
    %1591 = vmatmul.f32.gmra.mxu0 %v1444
    %v1592 = vpop.f32.mrf.mxu0
    %v1593 = vadd.f32 %v1508, %v1592
    %1594 = vmatmul.f32.gmra.mxu0 %v1446
    %v1595 = vpop.f32.mrf.mxu0
    %v1596 = vadd.f32 %v1508, %v1595
    %1597 = vmatmul.f32.gmra.mxu0 %v1448
    %v1598 = vpop.f32.mrf.mxu0
    %v1599 = vadd.f32 %v1508, %v1598
    %1600 = vmatmul.f32.gmra.mxu0 %v1450
    %v1601 = vpop.f32.mrf.mxu0
    %v1602 = vadd.f32 %v1508, %v1601
    %1603 = vmatmul.f32.gmra.mxu0 %v1452
    %v1604 = vpop.f32.mrf.mxu0
    %v1605 = vadd.f32 %v1508, %v1604
    %1606 = vmatmul.f32.gmra.mxu0 %v1454
    %v1607 = vpop.f32.mrf.mxu0
    %v1608 = vadd.f32 %v1508, %v1607
    %1609 = vmatmul.f32.gmra.mxu0 %v1456
    %v1610 = vpop.f32.mrf.mxu0
    %v1611 = vadd.f32 %v1508, %v1610
    %1612 = vmatmul.f32.gmra.mxu0 %v1458
    %v1613 = vpop.f32.mrf.mxu0
    %v1614 = vadd.f32 %v1508, %v1613
    %1615 = vmatmul.f32.gmra.mxu0 %v1460
    %v1616 = vpop.f32.mrf.mxu0
    %v1617 = vadd.f32 %v1508, %v1616
    %1618 = vmatmul.f32.gmra.mxu0 %v1462
    %v1619 = vpop.f32.mrf.mxu0
    %v1620 = vadd.f32 %v1508, %v1619
    %1621 = vmatmul.f32.gmra.mxu0 %v1464
    %v1622 = vpop.f32.mrf.mxu0
    %v1623 = vadd.f32 %v1508, %v1622
    %1624 = vmatmul.f32.gmra.mxu0 %v1466
    %v1625 = vpop.f32.mrf.mxu0
    %v1626 = vadd.f32 %v1508, %v1625
    %1627 = vmatmul.f32.gmra.mxu0 %v1468
    %v1628 = vpop.f32.mrf.mxu0
    %v1629 = vadd.f32 %v1508, %v1628
    %1630 = vmatmul.f32.gmra.mxu0 %v1470
    %v1631 = vpop.f32.mrf.mxu0
    %v1632 = vadd.f32 %v1508, %v1631
    %1633 = vmatmul.f32.gmra.mxu0 %v1472
    %v1634 = vpop.f32.mrf.mxu0
    %v1635 = vadd.f32 %v1508, %v1634
    %1636 = vmatmul.f32.gmra.mxu0 %v1474
    %v1637 = vpop.f32.mrf.mxu0
    %v1638 = vadd.f32 %v1508, %v1637
    %1639 = vdwg.mxu0
    %1640 = vmatpush.msra.mxu0 %v1507
    %1641 = vmatpush.msra.mxu0 %v1506
    %1642 = vmatpush.msra.mxu0 %v1505
    %1643 = vmatpush.msra.mxu0 %v1504
    %1644 = vmatpush.msra.mxu0 %v1503
    %1645 = vmatpush.msra.mxu0 %v1502
    %1646 = vmatpush.msra.mxu0 %v1501
    %1647 = vmatpush.msra.mxu0 %v1500
    %1648 = vmatpush.msra.mxu0 %v1499
    %1649 = vmatpush.msra.mxu0 %v1498
    %1650 = vmatpush.msra.mxu0 %v1497
    %1651 = vmatpush.msra.mxu0 %v1496
    %1652 = vmatpush.msra.mxu0 %v1495
    %1653 = vmatpush.msra.mxu0 %v1494
    %1654 = vmatpush.msra.mxu0 %v1493
    %1655 = vmatpush.msra.mxu0 %v1492
    %1656 = vmatmul.f32.gmra.mxu0 %v1401
    %v1657 = vpop.f32.mrf.mxu0
    %v1658 = vadd.f32 %v1527, %v1657
    %1659 = vmatmul.f32.gmra.mxu0 %v1403
    %v1660 = vpop.f32.mrf.mxu0
    %v1661 = vadd.f32 %v1530, %v1660
    %1662 = vmatmul.f32.gmra.mxu0 %v1405
    %v1663 = vpop.f32.mrf.mxu0
    %v1664 = vadd.f32 %v1533, %v1663
    %1665 = vmatmul.f32.gmra.mxu0 %v1407
    %v1666 = vpop.f32.mrf.mxu0
    %v1667 = vadd.f32 %v1536, %v1666
    %1668 = vmatmul.f32.gmra.mxu0 %v1409
    %v1669 = vpop.f32.mrf.mxu0
    %v1670 = vadd.f32 %v1539, %v1669
    %1671 = vmatmul.f32.gmra.mxu0 %v1411
    %v1672 = vpop.f32.mrf.mxu0
    %v1673 = vadd.f32 %v1542, %v1672
    %1674 = vmatmul.f32.gmra.mxu0 %v1413
    %v1675 = vpop.f32.mrf.mxu0
    %v1676 = vadd.f32 %v1545, %v1675
    %1677 = vmatmul.f32.gmra.mxu0 %v1415
    %v1678 = vpop.f32.mrf.mxu0
    %v1679 = vadd.f32 %v1548, %v1678
    %1680 = vmatmul.f32.gmra.mxu0 %v1417
    %v1681 = vpop.f32.mrf.mxu0
    %v1682 = vadd.f32 %v1551, %v1681
    %1683 = vmatmul.f32.gmra.mxu0 %v1419
    %v1684 = vpop.f32.mrf.mxu0
    %v1685 = vadd.f32 %v1554, %v1684
    %1686 = vmatmul.f32.gmra.mxu0 %v1421
    %v1687 = vpop.f32.mrf.mxu0
    %v1688 = vadd.f32 %v1557, %v1687
    %1689 = vmatmul.f32.gmra.mxu0 %v1423
    %v1690 = vpop.f32.mrf.mxu0
    %v1691 = vadd.f32 %v1560, %v1690
    %1692 = vmatmul.f32.gmra.mxu0 %v1425
    %v1693 = vpop.f32.mrf.mxu0
    %v1694 = vadd.f32 %v1563, %v1693
    %1695 = vmatmul.f32.gmra.mxu0 %v1427
    %v1696 = vpop.f32.mrf.mxu0
    %v1697 = vadd.f32 %v1566, %v1696
    %1698 = vmatmul.f32.gmra.mxu0 %v1429
    %v1699 = vpop.f32.mrf.mxu0
    %v1700 = vadd.f32 %v1569, %v1699
    %1701 = vmatmul.f32.gmra.mxu0 %v1431
    %v1702 = vpop.f32.mrf.mxu0
    %v1703 = vadd.f32 %v1572, %v1702
    %1704 = vmatmul.f32.gmra.mxu0 %v1433
    %v1705 = vpop.f32.mrf.mxu0
    %v1706 = vadd.f32 %v1575, %v1705
    %1707 = vmatmul.f32.gmra.mxu0 %v1435
    %v1708 = vpop.f32.mrf.mxu0
    %v1709 = vadd.f32 %v1578, %v1708
    %1710 = vmatmul.f32.gmra.mxu0 %v1437
    %v1711 = vpop.f32.mrf.mxu0
    %v1712 = vadd.f32 %v1581, %v1711
    %1713 = vmatmul.f32.gmra.mxu0 %v1439
    %v1714 = vpop.f32.mrf.mxu0
    %v1715 = vadd.f32 %v1584, %v1714
    %1716 = vmatmul.f32.gmra.mxu0 %v1441
    %v1717 = vpop.f32.mrf.mxu0
    %v1718 = vadd.f32 %v1587, %v1717
    %1719 = vmatmul.f32.gmra.mxu0 %v1443
    %v1720 = vpop.f32.mrf.mxu0
    %v1721 = vadd.f32 %v1590, %v1720
    %1722 = vmatmul.f32.gmra.mxu0 %v1445
    %v1723 = vpop.f32.mrf.mxu0
    %v1724 = vadd.f32 %v1593, %v1723
    %1725 = vmatmul.f32.gmra.mxu0 %v1447
    %v1726 = vpop.f32.mrf.mxu0
    %v1727 = vadd.f32 %v1596, %v1726
    %1728 = vmatmul.f32.gmra.mxu0 %v1449
    %v1729 = vpop.f32.mrf.mxu0
    %v1730 = vadd.f32 %v1599, %v1729
    %1731 = vmatmul.f32.gmra.mxu0 %v1451
    %v1732 = vpop.f32.mrf.mxu0
    %v1733 = vadd.f32 %v1602, %v1732
    %1734 = vmatmul.f32.gmra.mxu0 %v1453
    %v1735 = vpop.f32.mrf.mxu0
    %v1736 = vadd.f32 %v1605, %v1735
    %1737 = vmatmul.f32.gmra.mxu0 %v1455
    %v1738 = vpop.f32.mrf.mxu0
    %v1739 = vadd.f32 %v1608, %v1738
    %1740 = vmatmul.f32.gmra.mxu0 %v1457
    %v1741 = vpop.f32.mrf.mxu0
    %v1742 = vadd.f32 %v1611, %v1741
    %1743 = vmatmul.f32.gmra.mxu0 %v1459
    %v1744 = vpop.f32.mrf.mxu0
    %v1745 = vadd.f32 %v1614, %v1744
    %1746 = vmatmul.f32.gmra.mxu0 %v1461
    %v1747 = vpop.f32.mrf.mxu0
    %v1748 = vadd.f32 %v1617, %v1747
    %1749 = vmatmul.f32.gmra.mxu0 %v1463
    %v1750 = vpop.f32.mrf.mxu0
    %v1751 = vadd.f32 %v1620, %v1750
    %1752 = vmatmul.f32.gmra.mxu0 %v1465
    %v1753 = vpop.f32.mrf.mxu0
    %v1754 = vadd.f32 %v1623, %v1753
    %1755 = vmatmul.f32.gmra.mxu0 %v1467
    %v1756 = vpop.f32.mrf.mxu0
    %v1757 = vadd.f32 %v1626, %v1756
    %1758 = vmatmul.f32.gmra.mxu0 %v1469
    %v1759 = vpop.f32.mrf.mxu0
    %v1760 = vadd.f32 %v1629, %v1759
    %1761 = vmatmul.f32.gmra.mxu0 %v1471
    %v1762 = vpop.f32.mrf.mxu0
    %v1763 = vadd.f32 %v1632, %v1762
    %1764 = vmatmul.f32.gmra.mxu0 %v1473
    %v1765 = vpop.f32.mrf.mxu0
    %v1766 = vadd.f32 %v1635, %v1765
    %1767 = vmatmul.f32.gmra.mxu0 %v1475
    %v1768 = vpop.f32.mrf.mxu0
    %v1769 = vadd.f32 %v1638, %v1768
    %1770 = vdwg.mxu0
    %v1771 = vtanh.pop %v1658
    %v1772 = vtanh.pop %v1661
    %v1773 = vtanh.pop %v1664
    %v1774 = vtanh.pop %v1667
    %v1775 = vtanh.pop %v1670
    %v1776 = vtanh.pop %v1673
    %v1777 = vtanh.pop %v1676
    %v1778 = vtanh.pop %v1679
    %v1779 = vtanh.pop %v1682
    %v1780 = vtanh.pop %v1685
    %v1781 = vtanh.pop %v1688
    %v1782 = vtanh.pop %v1691
    %v1783 = vtanh.pop %v1694
    %v1784 = vtanh.pop %v1697
    %v1785 = vtanh.pop %v1700
    %v1786 = vtanh.pop %v1703
    %v1787 = vtanh.pop %v1706
    %v1788 = vtanh.pop %v1709
    %v1789 = vtanh.pop %v1712
    %v1790 = vtanh.pop %v1715
    %v1791 = vtanh.pop %v1718
    %v1792 = vtanh.pop %v1721
    %v1793 = vtanh.pop %v1724
    %v1794 = vtanh.pop %v1727
    %v1795 = vtanh.pop %v1730
    %v1796 = vtanh.pop %v1733
    %v1797 = vtanh.pop %v1736
    %v1798 = vtanh.pop %v1739
    %v1799 = vtanh.pop %v1742
    %v1800 = vtanh.pop %v1745
    %v1801 = vtanh.pop %v1748
    %v1802 = vtanh.pop %v1751
    %v1803 = vtanh.pop %v1754
    %v1804 = vtanh.pop %v1757
    %v1805 = vtanh.pop %v1760
    %v1806 = vtanh.pop %v1763
    %v1807 = vtanh.pop %v1766
    %v1808 = vtanh.pop %v1769
    %v1809 = vld [vmem:[#allocation7] sm:$0xff]
    %v1810 = vld [vmem:[#allocation7 + $0x8] sm:$0xff]
    %v1811 = vld [vmem:[#allocation7 + $0x10] sm:$0xff]
    %v1812 = vld [vmem:[#allocation7 + $0x18] sm:$0xff]
    %v1813 = vld [vmem:[#allocation7 + $0x20] sm:$0xff]
    %v1814 = vld [vmem:[#allocation7 + $0x28] sm:$0xff]
    %v1815 = vld [vmem:[#allocation7 + $0x30] sm:$0xff]
    %v1816 = vld [vmem:[#allocation7 + $0x38] sm:$0xff]
    %v1817 = vld [vmem:[#allocation7 + $0x40] sm:$0xff]
    %v1818 = vld [vmem:[#allocation7 + $0x48] sm:$0xff]
    %v1819 = vld [vmem:[#allocation7 + $0x50] sm:$0xff]
    %v1820 = vld [vmem:[#allocation7 + $0x58] sm:$0xff]
    %v1821 = vld [vmem:[#allocation7 + $0x60] sm:$0xff]
    %v1822 = vld [vmem:[#allocation7 + $0x68] sm:$0xff]
    %v1823 = vld [vmem:[#allocation7 + $0x70] sm:$0xff]
    %v1824 = vld [vmem:[#allocation7 + $0x78] sm:$0xff]
    %v1825 = vperm.slane %v111, 4
    %1826 = vmatpush.msra.mxu0 %v1824
    %1827 = vmatpush.msra.mxu0 %v1823
    %1828 = vmatpush.msra.mxu0 %v1822
    %1829 = vmatpush.msra.mxu0 %v1821
    %1830 = vmatpush.msra.mxu0 %v1820
    %1831 = vmatpush.msra.mxu0 %v1819
    %1832 = vmatpush.msra.mxu0 %v1818
    %1833 = vmatpush.msra.mxu0 %v1817
    %1834 = vmatpush.msra.mxu0 %v1816
    %1835 = vmatpush.msra.mxu0 %v1815
    %1836 = vmatpush.msra.mxu0 %v1814
    %1837 = vmatpush.msra.mxu0 %v1813
    %1838 = vmatpush.msra.mxu0 %v1812
    %1839 = vmatpush.msra.mxu0 %v1811
    %1840 = vmatpush.msra.mxu0 %v1810
    %1841 = vmatpush.msra.mxu0 %v1809
    %1842 = vmatmul.f32.gmra.mxu0 %v1771
    %v1843 = vpop.f32.mrf.mxu0
    %v1844 = vadd.f32 %v1825, %v1843
    %1845 = vmatmul.f32.gmra.mxu0 %v1772
    %v1846 = vpop.f32.mrf.mxu0
    %v1847 = vadd.f32 %v1825, %v1846
    %1848 = vmatmul.f32.gmra.mxu0 %v1773
    %v1849 = vpop.f32.mrf.mxu0
    %v1850 = vadd.f32 %v1825, %v1849
    %1851 = vmatmul.f32.gmra.mxu0 %v1774
    %v1852 = vpop.f32.mrf.mxu0
    %v1853 = vadd.f32 %v1825, %v1852
    %1854 = vmatmul.f32.gmra.mxu0 %v1775
    %v1855 = vpop.f32.mrf.mxu0
    %v1856 = vadd.f32 %v1825, %v1855
    %1857 = vmatmul.f32.gmra.mxu0 %v1776
    %v1858 = vpop.f32.mrf.mxu0
    %v1859 = vadd.f32 %v1825, %v1858
    %1860 = vmatmul.f32.gmra.mxu0 %v1777
    %v1861 = vpop.f32.mrf.mxu0
    %v1862 = vadd.f32 %v1825, %v1861
    %1863 = vmatmul.f32.gmra.mxu0 %v1778
    %v1864 = vpop.f32.mrf.mxu0
    %v1865 = vadd.f32 %v1825, %v1864
    %1866 = vmatmul.f32.gmra.mxu0 %v1779
    %v1867 = vpop.f32.mrf.mxu0
    %v1868 = vadd.f32 %v1825, %v1867
    %1869 = vmatmul.f32.gmra.mxu0 %v1780
    %v1870 = vpop.f32.mrf.mxu0
    %v1871 = vadd.f32 %v1825, %v1870
    %1872 = vmatmul.f32.gmra.mxu0 %v1781
    %v1873 = vpop.f32.mrf.mxu0
    %v1874 = vadd.f32 %v1825, %v1873
    %1875 = vmatmul.f32.gmra.mxu0 %v1782
    %v1876 = vpop.f32.mrf.mxu0
    %v1877 = vadd.f32 %v1825, %v1876
    %1878 = vmatmul.f32.gmra.mxu0 %v1783
    %v1879 = vpop.f32.mrf.mxu0
    %v1880 = vadd.f32 %v1825, %v1879
    %1881 = vmatmul.f32.gmra.mxu0 %v1784
    %v1882 = vpop.f32.mrf.mxu0
    %v1883 = vadd.f32 %v1825, %v1882
    %1884 = vmatmul.f32.gmra.mxu0 %v1785
    %v1885 = vpop.f32.mrf.mxu0
    %v1886 = vadd.f32 %v1825, %v1885
    %1887 = vmatmul.f32.gmra.mxu0 %v1786
    %v1888 = vpop.f32.mrf.mxu0
    %v1889 = vadd.f32 %v1825, %v1888
    %1890 = vmatmul.f32.gmra.mxu0 %v1787
    %v1891 = vpop.f32.mrf.mxu0
    %v1892 = vadd.f32 %v1825, %v1891
    %1893 = vmatmul.f32.gmra.mxu0 %v1788
    %v1894 = vpop.f32.mrf.mxu0
    %v1895 = vadd.f32 %v1825, %v1894
    %1896 = vmatmul.f32.gmra.mxu0 %v1789
    %v1897 = vpop.f32.mrf.mxu0
    %v1898 = vadd.f32 %v1825, %v1897
    %1899 = vmatmul.f32.gmra.mxu0 %v1790
    %v1900 = vpop.f32.mrf.mxu0
    %v1901 = vadd.f32 %v1825, %v1900
    %1902 = vmatmul.f32.gmra.mxu0 %v1791
    %v1903 = vpop.f32.mrf.mxu0
    %v1904 = vadd.f32 %v1825, %v1903
    %1905 = vmatmul.f32.gmra.mxu0 %v1792
    %v1906 = vpop.f32.mrf.mxu0
    %v1907 = vadd.f32 %v1825, %v1906
    %1908 = vmatmul.f32.gmra.mxu0 %v1793
    %v1909 = vpop.f32.mrf.mxu0
    %v1910 = vadd.f32 %v1825, %v1909
    %1911 = vmatmul.f32.gmra.mxu0 %v1794
    %v1912 = vpop.f32.mrf.mxu0
    %v1913 = vadd.f32 %v1825, %v1912
    %1914 = vmatmul.f32.gmra.mxu0 %v1795
    %v1915 = vpop.f32.mrf.mxu0
    %v1916 = vadd.f32 %v1825, %v1915
    %1917 = vmatmul.f32.gmra.mxu0 %v1796
    %v1918 = vpop.f32.mrf.mxu0
    %v1919 = vadd.f32 %v1825, %v1918
    %1920 = vmatmul.f32.gmra.mxu0 %v1797
    %v1921 = vpop.f32.mrf.mxu0
    %v1922 = vadd.f32 %v1825, %v1921
    %1923 = vmatmul.f32.gmra.mxu0 %v1798
    %v1924 = vpop.f32.mrf.mxu0
    %v1925 = vadd.f32 %v1825, %v1924
    %1926 = vmatmul.f32.gmra.mxu0 %v1799
    %v1927 = vpop.f32.mrf.mxu0
    %v1928 = vadd.f32 %v1825, %v1927
    %1929 = vmatmul.f32.gmra.mxu0 %v1800
    %v1930 = vpop.f32.mrf.mxu0
    %v1931 = vadd.f32 %v1825, %v1930
    %1932 = vmatmul.f32.gmra.mxu0 %v1801
    %v1933 = vpop.f32.mrf.mxu0
    %v1934 = vadd.f32 %v1825, %v1933
    %1935 = vmatmul.f32.gmra.mxu0 %v1802
    %v1936 = vpop.f32.mrf.mxu0
    %v1937 = vadd.f32 %v1825, %v1936
    %1938 = vmatmul.f32.gmra.mxu0 %v1803
    %v1939 = vpop.f32.mrf.mxu0
    %v1940 = vadd.f32 %v1825, %v1939
    %1941 = vmatmul.f32.gmra.mxu0 %v1804
    %v1942 = vpop.f32.mrf.mxu0
    %v1943 = vadd.f32 %v1825, %v1942
    %1944 = vmatmul.f32.gmra.mxu0 %v1805
    %v1945 = vpop.f32.mrf.mxu0
    %v1946 = vadd.f32 %v1825, %v1945
    %1947 = vmatmul.f32.gmra.mxu0 %v1806
    %v1948 = vpop.f32.mrf.mxu0
    %v1949 = vadd.f32 %v1825, %v1948
    %1950 = vmatmul.f32.gmra.mxu0 %v1807
    %v1951 = vpop.f32.mrf.mxu0
    %v1952 = vadd.f32 %v1825, %v1951
    %1953 = vmatmul.f32.gmra.mxu0 %v1808
    %v1954 = vpop.f32.mrf.mxu0
    %v1955 = vadd.f32 %v1825, %v1954
    %1956 = vdwg.mxu0
    %v1957 = vtanh.pop %v1844
    %v1958 = vtanh.pop %v1847
    %v1959 = vtanh.pop %v1850
    %v1960 = vtanh.pop %v1853
    %v1961 = vtanh.pop %v1856
    %v1962 = vtanh.pop %v1859
    %v1963 = vtanh.pop %v1862
    %v1964 = vtanh.pop %v1865
    %v1965 = vtanh.pop %v1868
    %v1966 = vtanh.pop %v1871
    %v1967 = vtanh.pop %v1874
    %v1968 = vtanh.pop %v1877
    %v1969 = vtanh.pop %v1880
    %v1970 = vtanh.pop %v1883
    %v1971 = vtanh.pop %v1886
    %v1972 = vtanh.pop %v1889
    %v1973 = vtanh.pop %v1892
    %v1974 = vtanh.pop %v1895
    %v1975 = vtanh.pop %v1898
    %v1976 = vtanh.pop %v1901
    %v1977 = vtanh.pop %v1904
    %v1978 = vtanh.pop %v1907
    %v1979 = vtanh.pop %v1910
    %v1980 = vtanh.pop %v1913
    %v1981 = vtanh.pop %v1916
    %v1982 = vtanh.pop %v1919
    %v1983 = vtanh.pop %v1922
    %v1984 = vtanh.pop %v1925
    %v1985 = vtanh.pop %v1928
    %v1986 = vtanh.pop %v1931
    %v1987 = vtanh.pop %v1934
    %v1988 = vtanh.pop %v1937
    %v1989 = vtanh.pop %v1940
    %v1990 = vtanh.pop %v1943
    %v1991 = vtanh.pop %v1946
    %v1992 = vtanh.pop %v1949
    %v1993 = vtanh.pop %v1952
    %v1994 = vtanh.pop %v1955
    %v1995 = vld [vmem:[#allocation8] sm:$0xff]
    %v1996 = vld [vmem:[#allocation8 + $0x8] sm:$0xff]
    %v1997 = vld [vmem:[#allocation8 + $0x10] sm:$0xff]
    %v1998 = vld [vmem:[#allocation8 + $0x18] sm:$0xff]
    %v1999 = vld [vmem:[#allocation8 + $0x20] sm:$0xff]
    %v2000 = vld [vmem:[#allocation8 + $0x28] sm:$0xff]
    %v2001 = vld [vmem:[#allocation8 + $0x30] sm:$0xff]
    %v2002 = vld [vmem:[#allocation8 + $0x38] sm:$0xff]
    %v2003 = vld [vmem:[#allocation8 + $0x40] sm:$0xff]
    %v2004 = vld [vmem:[#allocation8 + $0x48] sm:$0xff]
    %v2005 = vld [vmem:[#allocation8 + $0x50] sm:$0xff]
    %v2006 = vld [vmem:[#allocation8 + $0x58] sm:$0xff]
    %v2007 = vld [vmem:[#allocation8 + $0x60] sm:$0xff]
    %v2008 = vld [vmem:[#allocation8 + $0x68] sm:$0xff]
    %v2009 = vld [vmem:[#allocation8 + $0x70] sm:$0xff]
    %v2010 = vld [vmem:[#allocation8 + $0x78] sm:$0xff]
    %v2011 = vperm.slane %v111, 5
    %2012 = vmatpush.msra.mxu0 %v2010
    %2013 = vmatpush.msra.mxu0 %v2009
    %2014 = vmatpush.msra.mxu0 %v2008
    %2015 = vmatpush.msra.mxu0 %v2007
    %2016 = vmatpush.msra.mxu0 %v2006
    %2017 = vmatpush.msra.mxu0 %v2005
    %2018 = vmatpush.msra.mxu0 %v2004
    %2019 = vmatpush.msra.mxu0 %v2003
    %2020 = vmatpush.msra.mxu0 %v2002
    %2021 = vmatpush.msra.mxu0 %v2001
    %2022 = vmatpush.msra.mxu0 %v2000
    %2023 = vmatpush.msra.mxu0 %v1999
    %2024 = vmatpush.msra.mxu0 %v1998
    %2025 = vmatpush.msra.mxu0 %v1997
    %2026 = vmatpush.msra.mxu0 %v1996
    %2027 = vmatpush.msra.mxu0 %v1995
    %2028 = vmatmul.f32.gmra.mxu0 %v1957
    %v2029 = vpop.f32.mrf.mxu0
    %v2030 = vadd.f32 %v2011, %v2029
    %2031 = vmatmul.f32.gmra.mxu0 %v1958
    %v2032 = vpop.f32.mrf.mxu0
    %v2033 = vadd.f32 %v2011, %v2032
    %2034 = vmatmul.f32.gmra.mxu0 %v1959
    %v2035 = vpop.f32.mrf.mxu0
    %v2036 = vadd.f32 %v2011, %v2035
    %2037 = vmatmul.f32.gmra.mxu0 %v1960
    %v2038 = vpop.f32.mrf.mxu0
    %v2039 = vadd.f32 %v2011, %v2038
    %2040 = vmatmul.f32.gmra.mxu0 %v1961
    %v2041 = vpop.f32.mrf.mxu0
    %v2042 = vadd.f32 %v2011, %v2041
    %2043 = vmatmul.f32.gmra.mxu0 %v1962
    %v2044 = vpop.f32.mrf.mxu0
    %v2045 = vadd.f32 %v2011, %v2044
    %2046 = vmatmul.f32.gmra.mxu0 %v1963
    %v2047 = vpop.f32.mrf.mxu0
    %v2048 = vadd.f32 %v2011, %v2047
    %2049 = vmatmul.f32.gmra.mxu0 %v1964
    %v2050 = vpop.f32.mrf.mxu0
    %v2051 = vadd.f32 %v2011, %v2050
    %2052 = vmatmul.f32.gmra.mxu0 %v1965
    %v2053 = vpop.f32.mrf.mxu0
    %v2054 = vadd.f32 %v2011, %v2053
    %2055 = vmatmul.f32.gmra.mxu0 %v1966
    %v2056 = vpop.f32.mrf.mxu0
    %v2057 = vadd.f32 %v2011, %v2056
    %2058 = vmatmul.f32.gmra.mxu0 %v1967
    %v2059 = vpop.f32.mrf.mxu0
    %v2060 = vadd.f32 %v2011, %v2059
    %2061 = vmatmul.f32.gmra.mxu0 %v1968
    %v2062 = vpop.f32.mrf.mxu0
    %v2063 = vadd.f32 %v2011, %v2062
    %2064 = vmatmul.f32.gmra.mxu0 %v1969
    %v2065 = vpop.f32.mrf.mxu0
    %v2066 = vadd.f32 %v2011, %v2065
    %2067 = vmatmul.f32.gmra.mxu0 %v1970
    %v2068 = vpop.f32.mrf.mxu0
    %v2069 = vadd.f32 %v2011, %v2068
    %2070 = vmatmul.f32.gmra.mxu0 %v1971
    %v2071 = vpop.f32.mrf.mxu0
    %v2072 = vadd.f32 %v2011, %v2071
    %2073 = vmatmul.f32.gmra.mxu0 %v1972
    %v2074 = vpop.f32.mrf.mxu0
    %v2075 = vadd.f32 %v2011, %v2074
    %2076 = vmatmul.f32.gmra.mxu0 %v1973
    %v2077 = vpop.f32.mrf.mxu0
    %v2078 = vadd.f32 %v2011, %v2077
    %2079 = vmatmul.f32.gmra.mxu0 %v1974
    %v2080 = vpop.f32.mrf.mxu0
    %v2081 = vadd.f32 %v2011, %v2080
    %2082 = vmatmul.f32.gmra.mxu0 %v1975
    %v2083 = vpop.f32.mrf.mxu0
    %v2084 = vadd.f32 %v2011, %v2083
    %2085 = vmatmul.f32.gmra.mxu0 %v1976
    %v2086 = vpop.f32.mrf.mxu0
    %v2087 = vadd.f32 %v2011, %v2086
    %2088 = vmatmul.f32.gmra.mxu0 %v1977
    %v2089 = vpop.f32.mrf.mxu0
    %v2090 = vadd.f32 %v2011, %v2089
    %2091 = vmatmul.f32.gmra.mxu0 %v1978
    %v2092 = vpop.f32.mrf.mxu0
    %v2093 = vadd.f32 %v2011, %v2092
    %2094 = vmatmul.f32.gmra.mxu0 %v1979
    %v2095 = vpop.f32.mrf.mxu0
    %v2096 = vadd.f32 %v2011, %v2095
    %2097 = vmatmul.f32.gmra.mxu0 %v1980
    %v2098 = vpop.f32.mrf.mxu0
    %v2099 = vadd.f32 %v2011, %v2098
    %2100 = vmatmul.f32.gmra.mxu0 %v1981
    %v2101 = vpop.f32.mrf.mxu0
    %v2102 = vadd.f32 %v2011, %v2101
    %2103 = vmatmul.f32.gmra.mxu0 %v1982
    %v2104 = vpop.f32.mrf.mxu0
    %v2105 = vadd.f32 %v2011, %v2104
    %2106 = vmatmul.f32.gmra.mxu0 %v1983
    %v2107 = vpop.f32.mrf.mxu0
    %v2108 = vadd.f32 %v2011, %v2107
    %2109 = vmatmul.f32.gmra.mxu0 %v1984
    %v2110 = vpop.f32.mrf.mxu0
    %v2111 = vadd.f32 %v2011, %v2110
    %2112 = vmatmul.f32.gmra.mxu0 %v1985
    %v2113 = vpop.f32.mrf.mxu0
    %v2114 = vadd.f32 %v2011, %v2113
    %2115 = vmatmul.f32.gmra.mxu0 %v1986
    %v2116 = vpop.f32.mrf.mxu0
    %v2117 = vadd.f32 %v2011, %v2116
    %2118 = vmatmul.f32.gmra.mxu0 %v1987
    %v2119 = vpop.f32.mrf.mxu0
    %v2120 = vadd.f32 %v2011, %v2119
    %2121 = vmatmul.f32.gmra.mxu0 %v1988
    %v2122 = vpop.f32.mrf.mxu0
    %v2123 = vadd.f32 %v2011, %v2122
    %2124 = vmatmul.f32.gmra.mxu0 %v1989
    %v2125 = vpop.f32.mrf.mxu0
    %v2126 = vadd.f32 %v2011, %v2125
    %2127 = vmatmul.f32.gmra.mxu0 %v1990
    %v2128 = vpop.f32.mrf.mxu0
    %v2129 = vadd.f32 %v2011, %v2128
    %2130 = vmatmul.f32.gmra.mxu0 %v1991
    %v2131 = vpop.f32.mrf.mxu0
    %v2132 = vadd.f32 %v2011, %v2131
    %2133 = vmatmul.f32.gmra.mxu0 %v1992
    %v2134 = vpop.f32.mrf.mxu0
    %v2135 = vadd.f32 %v2011, %v2134
    %2136 = vmatmul.f32.gmra.mxu0 %v1993
    %v2137 = vpop.f32.mrf.mxu0
    %v2138 = vadd.f32 %v2011, %v2137
    %2139 = vmatmul.f32.gmra.mxu0 %v1994
    %v2140 = vpop.f32.mrf.mxu0
    %v2141 = vadd.f32 %v2011, %v2140
    %2142 = vdwg.mxu0
    %v2143 = vtanh.pop %v2030
    %v2144 = vtanh.pop %v2033
    %v2145 = vtanh.pop %v2036
    %v2146 = vtanh.pop %v2039
    %v2147 = vtanh.pop %v2042
    %v2148 = vtanh.pop %v2045
    %v2149 = vtanh.pop %v2048
    %v2150 = vtanh.pop %v2051
    %v2151 = vtanh.pop %v2054
    %v2152 = vtanh.pop %v2057
    %v2153 = vtanh.pop %v2060
    %v2154 = vtanh.pop %v2063
    %v2155 = vtanh.pop %v2066
    %v2156 = vtanh.pop %v2069
    %v2157 = vtanh.pop %v2072
    %v2158 = vtanh.pop %v2075
    %v2159 = vtanh.pop %v2078
    %v2160 = vtanh.pop %v2081
    %v2161 = vtanh.pop %v2084
    %v2162 = vtanh.pop %v2087
    %v2163 = vtanh.pop %v2090
    %v2164 = vtanh.pop %v2093
    %v2165 = vtanh.pop %v2096
    %v2166 = vtanh.pop %v2099
    %v2167 = vtanh.pop %v2102
    %v2168 = vtanh.pop %v2105
    %v2169 = vtanh.pop %v2108
    %v2170 = vtanh.pop %v2111
    %v2171 = vtanh.pop %v2114
    %v2172 = vtanh.pop %v2117
    %v2173 = vtanh.pop %v2120
    %v2174 = vtanh.pop %v2123
    %v2175 = vtanh.pop %v2126
    %v2176 = vtanh.pop %v2129
    %v2177 = vtanh.pop %v2132
    %v2178 = vtanh.pop %v2135
    %v2179 = vtanh.pop %v2138
    %v2180 = vtanh.pop %v2141
    %v2181 = vld [vmem:[#allocation10] sm:$0xff]
    %v2182 = vld [vmem:[#allocation10 + $0x8] sm:$0xff]
    %v2183 = vld [vmem:[#allocation10 + $0x10] sm:$0xff]
    %v2184 = vld [vmem:[#allocation10 + $0x18] sm:$0xff]
    %v2185 = vld [vmem:[#allocation10 + $0x20] sm:$0xff]
    %v2186 = vld [vmem:[#allocation10 + $0x28] sm:$0xff]
    %v2187 = vld [vmem:[#allocation10 + $0x30] sm:$0xff]
    %v2188 = vld [vmem:[#allocation10 + $0x38] sm:$0xff]
    %v2189 = vld [vmem:[#allocation10 + $0x40] sm:$0xff]
    %v2190 = vld [vmem:[#allocation10 + $0x48] sm:$0xff]
    %v2191 = vld [vmem:[#allocation10 + $0x50] sm:$0xff]
    %v2192 = vld [vmem:[#allocation10 + $0x58] sm:$0xff]
    %v2193 = vld [vmem:[#allocation10 + $0x60] sm:$0xff]
    %v2194 = vld [vmem:[#allocation10 + $0x68] sm:$0xff]
    %v2195 = vld [vmem:[#allocation10 + $0x70] sm:$0xff]
    %v2196 = vld [vmem:[#allocation10 + $0x78] sm:$0xff]
    %v2197 = vperm.slane %v111, 6
    %2198 = vmatpush.msra.mxu0 %v2196
    %2199 = vmatpush.msra.mxu0 %v2195
    %2200 = vmatpush.msra.mxu0 %v2194
    %2201 = vmatpush.msra.mxu0 %v2193
    %2202 = vmatpush.msra.mxu0 %v2192
    %2203 = vmatpush.msra.mxu0 %v2191
    %2204 = vmatpush.msra.mxu0 %v2190
    %2205 = vmatpush.msra.mxu0 %v2189
    %2206 = vmatpush.msra.mxu0 %v2188
    %2207 = vmatpush.msra.mxu0 %v2187
    %2208 = vmatpush.msra.mxu0 %v2186
    %2209 = vmatpush.msra.mxu0 %v2185
    %2210 = vmatpush.msra.mxu0 %v2184
    %2211 = vmatpush.msra.mxu0 %v2183
    %2212 = vmatpush.msra.mxu0 %v2182
    %2213 = vmatpush.msra.mxu0 %v2181
    %2214 = vmatmul.f32.gmra.mxu0 %v2143
    %v2215 = vpop.f32.mrf.mxu0
    %v2216 = vadd.f32 %v2197, %v2215
    %2217 = vmatmul.f32.gmra.mxu0 %v2144
    %v2218 = vpop.f32.mrf.mxu0
    %v2219 = vadd.f32 %v2197, %v2218
    %2220 = vmatmul.f32.gmra.mxu0 %v2145
    %v2221 = vpop.f32.mrf.mxu0
    %v2222 = vadd.f32 %v2197, %v2221
    %2223 = vmatmul.f32.gmra.mxu0 %v2146
    %v2224 = vpop.f32.mrf.mxu0
    %v2225 = vadd.f32 %v2197, %v2224
    %2226 = vmatmul.f32.gmra.mxu0 %v2147
    %v2227 = vpop.f32.mrf.mxu0
    %v2228 = vadd.f32 %v2197, %v2227
    %2229 = vmatmul.f32.gmra.mxu0 %v2148
    %v2230 = vpop.f32.mrf.mxu0
    %v2231 = vadd.f32 %v2197, %v2230
    %2232 = vmatmul.f32.gmra.mxu0 %v2149
    %v2233 = vpop.f32.mrf.mxu0
    %v2234 = vadd.f32 %v2197, %v2233
    %2235 = vmatmul.f32.gmra.mxu0 %v2150
    %v2236 = vpop.f32.mrf.mxu0
    %v2237 = vadd.f32 %v2197, %v2236
    %2238 = vmatmul.f32.gmra.mxu0 %v2151
    %v2239 = vpop.f32.mrf.mxu0
    %v2240 = vadd.f32 %v2197, %v2239
    %2241 = vmatmul.f32.gmra.mxu0 %v2152
    %v2242 = vpop.f32.mrf.mxu0
    %v2243 = vadd.f32 %v2197, %v2242
    %2244 = vmatmul.f32.gmra.mxu0 %v2153
    %v2245 = vpop.f32.mrf.mxu0
    %v2246 = vadd.f32 %v2197, %v2245
    %2247 = vmatmul.f32.gmra.mxu0 %v2154
    %v2248 = vpop.f32.mrf.mxu0
    %v2249 = vadd.f32 %v2197, %v2248
    %2250 = vmatmul.f32.gmra.mxu0 %v2155
    %v2251 = vpop.f32.mrf.mxu0
    %v2252 = vadd.f32 %v2197, %v2251
    %2253 = vmatmul.f32.gmra.mxu0 %v2156
    %v2254 = vpop.f32.mrf.mxu0
    %v2255 = vadd.f32 %v2197, %v2254
    %2256 = vmatmul.f32.gmra.mxu0 %v2157
    %v2257 = vpop.f32.mrf.mxu0
    %v2258 = vadd.f32 %v2197, %v2257
    %2259 = vmatmul.f32.gmra.mxu0 %v2158
    %v2260 = vpop.f32.mrf.mxu0
    %v2261 = vadd.f32 %v2197, %v2260
    %2262 = vmatmul.f32.gmra.mxu0 %v2159
    %v2263 = vpop.f32.mrf.mxu0
    %v2264 = vadd.f32 %v2197, %v2263
    %2265 = vmatmul.f32.gmra.mxu0 %v2160
    %v2266 = vpop.f32.mrf.mxu0
    %v2267 = vadd.f32 %v2197, %v2266
    %2268 = vmatmul.f32.gmra.mxu0 %v2161
    %v2269 = vpop.f32.mrf.mxu0
    %v2270 = vadd.f32 %v2197, %v2269
    %2271 = vmatmul.f32.gmra.mxu0 %v2162
    %v2272 = vpop.f32.mrf.mxu0
    %v2273 = vadd.f32 %v2197, %v2272
    %2274 = vmatmul.f32.gmra.mxu0 %v2163
    %v2275 = vpop.f32.mrf.mxu0
    %v2276 = vadd.f32 %v2197, %v2275
    %2277 = vmatmul.f32.gmra.mxu0 %v2164
    %v2278 = vpop.f32.mrf.mxu0
    %v2279 = vadd.f32 %v2197, %v2278
    %2280 = vmatmul.f32.gmra.mxu0 %v2165
    %v2281 = vpop.f32.mrf.mxu0
    %v2282 = vadd.f32 %v2197, %v2281
    %2283 = vmatmul.f32.gmra.mxu0 %v2166
    %v2284 = vpop.f32.mrf.mxu0
    %v2285 = vadd.f32 %v2197, %v2284
    %2286 = vmatmul.f32.gmra.mxu0 %v2167
    %v2287 = vpop.f32.mrf.mxu0
    %v2288 = vadd.f32 %v2197, %v2287
    %2289 = vmatmul.f32.gmra.mxu0 %v2168
    %v2290 = vpop.f32.mrf.mxu0
    %v2291 = vadd.f32 %v2197, %v2290
    %2292 = vmatmul.f32.gmra.mxu0 %v2169
    %v2293 = vpop.f32.mrf.mxu0
    %v2294 = vadd.f32 %v2197, %v2293
    %2295 = vmatmul.f32.gmra.mxu0 %v2170
    %v2296 = vpop.f32.mrf.mxu0
    %v2297 = vadd.f32 %v2197, %v2296
    %2298 = vmatmul.f32.gmra.mxu0 %v2171
    %v2299 = vpop.f32.mrf.mxu0
    %v2300 = vadd.f32 %v2197, %v2299
    %2301 = vmatmul.f32.gmra.mxu0 %v2172
    %v2302 = vpop.f32.mrf.mxu0
    %v2303 = vadd.f32 %v2197, %v2302
    %2304 = vmatmul.f32.gmra.mxu0 %v2173
    %v2305 = vpop.f32.mrf.mxu0
    %v2306 = vadd.f32 %v2197, %v2305
    %2307 = vmatmul.f32.gmra.mxu0 %v2174
    %v2308 = vpop.f32.mrf.mxu0
    %v2309 = vadd.f32 %v2197, %v2308
    %2310 = vmatmul.f32.gmra.mxu0 %v2175
    %v2311 = vpop.f32.mrf.mxu0
    %v2312 = vadd.f32 %v2197, %v2311
    %2313 = vmatmul.f32.gmra.mxu0 %v2176
    %v2314 = vpop.f32.mrf.mxu0
    %v2315 = vadd.f32 %v2197, %v2314
    %2316 = vmatmul.f32.gmra.mxu0 %v2177
    %v2317 = vpop.f32.mrf.mxu0
    %v2318 = vadd.f32 %v2197, %v2317
    %2319 = vmatmul.f32.gmra.mxu0 %v2178
    %v2320 = vpop.f32.mrf.mxu0
    %v2321 = vadd.f32 %v2197, %v2320
    %2322 = vmatmul.f32.gmra.mxu0 %v2179
    %v2323 = vpop.f32.mrf.mxu0
    %v2324 = vadd.f32 %v2197, %v2323
    %2325 = vmatmul.f32.gmra.mxu0 %v2180
    %v2326 = vpop.f32.mrf.mxu0
    %v2327 = vadd.f32 %v2197, %v2326
    %2328 = vdwg.mxu0
    %2329 = vst [vmem:[#allocation11] sm:$0xff] %v2216
    %2330 = vst [vmem:[#allocation11 + $0x8] sm:$0xff] %v2219
    %2331 = vst [vmem:[#allocation11 + $0x10] sm:$0xff] %v2222
    %2332 = vst [vmem:[#allocation11 + $0x18] sm:$0xff] %v2225
    %2333 = vst [vmem:[#allocation11 + $0x20] sm:$0xff] %v2228
    %2334 = vst [vmem:[#allocation11 + $0x28] sm:$0xff] %v2231
    %2335 = vst [vmem:[#allocation11 + $0x30] sm:$0xff] %v2234
    %2336 = vst [vmem:[#allocation11 + $0x38] sm:$0xff] %v2237
    %2337 = vst [vmem:[#allocation11 + $0x40] sm:$0xff] %v2240
    %2338 = vst [vmem:[#allocation11 + $0x48] sm:$0xff] %v2243
    %2339 = vst [vmem:[#allocation11 + $0x50] sm:$0xff] %v2246
    %2340 = vst [vmem:[#allocation11 + $0x58] sm:$0xff] %v2249
    %2341 = vst [vmem:[#allocation11 + $0x60] sm:$0xff] %v2252
    %2342 = vst [vmem:[#allocation11 + $0x68] sm:$0xff] %v2255
    %2343 = vst [vmem:[#allocation11 + $0x70] sm:$0xff] %v2258
    %2344 = vst [vmem:[#allocation11 + $0x78] sm:$0xff] %v2261
    %2345 = vst [vmem:[#allocation11 + $0x80] sm:$0xff] %v2264
    %2346 = vst [vmem:[#allocation11 + $0x88] sm:$0xff] %v2267
    %2347 = vst [vmem:[#allocation11 + $0x90] sm:$0xff] %v2270
    %2348 = vst [vmem:[#allocation11 + $0x98] sm:$0xff] %v2273
    %2349 = vst [vmem:[#allocation11 + $0xa0] sm:$0xff] %v2276
    %2350 = vst [vmem:[#allocation11 + $0xa8] sm:$0xff] %v2279
    %2351 = vst [vmem:[#allocation11 + $0xb0] sm:$0xff] %v2282
    %2352 = vst [vmem:[#allocation11 + $0xb8] sm:$0xff] %v2285
    %2353 = vst [vmem:[#allocation11 + $0xc0] sm:$0xff] %v2288
    %2354 = vst [vmem:[#allocation11 + $0xc8] sm:$0xff] %v2291
    %2355 = vst [vmem:[#allocation11 + $0xd0] sm:$0xff] %v2294
    %2356 = vst [vmem:[#allocation11 + $0xd8] sm:$0xff] %v2297
    %2357 = vst [vmem:[#allocation11 + $0xe0] sm:$0xff] %v2300
    %2358 = vst [vmem:[#allocation11 + $0xe8] sm:$0xff] %v2303
    %2359 = vst [vmem:[#allocation11 + $0xf0] sm:$0xff] %v2306
    %2360 = vst [vmem:[#allocation11 + $0xf8] sm:$0xff] %v2309
    %2361 = vst [vmem:[#allocation11 + $0x100] sm:$0xff] %v2312
    %2362 = vst [vmem:[#allocation11 + $0x108] sm:$0xff] %v2315
    %2363 = vst [vmem:[#allocation11 + $0x110] sm:$0xff] %v2318
    %2364 = vst [vmem:[#allocation11 + $0x118] sm:$0xff] %v2321
    %2365 = vst [vmem:[#allocation11 + $0x120] sm:$0xff] %v2324
    %2366 = vst [vmem:[#allocation11 + $0x128] sm:$0xff] %v2327
    // Predicated region
    $region58: #{tpu_custom_call.1} parent=1 // pred_check
      _
    $region59: #{tpu_custom_call.1} parent=1 // pred_check_branch
      %2368 = sbr.rel (0) target = $region61
    $region60: #{tpu_custom_call.1} parent=1 // pred_region
      %2370 = vsyncadd [#allocation4], 0
      %s2371 = sshll.u32 [#allocation11], 4
      %s2372 = int_to_ptr.vmem [resolvable:$true] %s2371
      %s2373 = sshll.u32 %s9, 4
      %s2374 = int_to_ptr.hbm [resolvable:$true] %s2373
      %2379 = dma.vmem_to_hbm [thread:$0]  %s2372, 4864, %s2374, [#allocation4], 128, 128, 8
    $region61: #{tpu_custom_call.1} parent=1 // pred_fallthru
      _
    // Predicated region
    $region62: #{tpu_custom_call.1} parent=1 // pred_check
      _
    $region63: #{tpu_custom_call.1} parent=1 // pred_check_branch
      %2381 = sbr.rel (0) target = $region65
    $region64: #{tpu_custom_call.1} parent=1 // pred_region
      %2383 = dma.done [#allocation4], 4864
    $region65: #{tpu_custom_call.1} parent=1 // pred_fallthru
      _
    %2384 = vsyncpa [#allocation3], 1
    %2385 = vsyncpa [#allocation6], 1
    %2386 = vsyncpa [#allocation9], 1
    %2387 = vsyncpa [#allocation4], 1

</llo_original>
